<compile_context>
chip_gen: v6e
topology: v6e:2x2x1
jax: 0.10.0
libtpu: 0.0.40
codegen_flags: <defaults>
</compile_context>

<pallas_src>
import functools
import numpy as np
import jax
import jax.numpy as jnp
from jax.experimental import pallas as pl
from jax.experimental.pallas import tpu as pltpu

# ----------------------------- cfg constants (standard Faster R-CNN) ------------
RPN_CLOBBER_POSITIVES = False
RPN_NEGATIVE_OVERLAP = 0.3
RPN_POSITIVE_OVERLAP = 0.7
RPN_FG_FRACTION = 0.5
RPN_BATCHSIZE = 256
RPN_BBOX_INSIDE_WEIGHTS = (1.0, 1.0, 1.0, 1.0)
RPN_POSITIVE_WEIGHT = -1.0


# ----------------------------- generate_anchors (deterministic) -----------------
def _whctrs(anchor):
    w = anchor[2] - anchor[0] + 1
    h = anchor[3] - anchor[1] + 1
    x_ctr = anchor[0] + 0.5 * (w - 1)
    y_ctr = anchor[1] + 0.5 * (h - 1)
    return w, h, x_ctr, y_ctr


def _mkanchors(ws, hs, x_ctr, y_ctr):
    ws = ws[:, np.newaxis]
    hs = hs[:, np.newaxis]
    return np.hstack((x_ctr - 0.5 * (ws - 1), y_ctr - 0.5 * (hs - 1),
                      x_ctr + 0.5 * (ws - 1), y_ctr + 0.5 * (hs - 1)))


def _ratio_enum(anchor, ratios):
    w, h, x_ctr, y_ctr = _whctrs(anchor)
    size = w * h
    size_ratios = size / ratios
    ws = np.round(np.sqrt(size_ratios))
    hs = np.round(ws * ratios)
    return _mkanchors(ws, hs, x_ctr, y_ctr)


def _scale_enum(anchor, scales):
    w, h, x_ctr, y_ctr = _whctrs(anchor)
    ws = w * scales
    hs = h * scales
    return _mkanchors(ws, hs, x_ctr, y_ctr)


def generate_anchors(base_size=16, ratios=np.array([0.5, 1, 2]),
                     scales=2 ** np.arange(3, 6)):
    base_anchor = np.array([1, 1, base_size, base_size], dtype=np.float64) - 1
    ratio_anchors = _ratio_enum(base_anchor, ratios)
    return np.vstack([_scale_enum(ratio_anchors[i, :], scales)
                      for i in range(ratio_anchors.shape[0])]).astype(np.float32)


# ----------------------------- fused, tiled Pallas kernel ------------------------
def _anchor_target_kernel(nvalid_ref, gt_ref, anchors_ref, out_ref, gmax_ref, *,
                          n_gt, clobber, pos_thr, neg_thr):
    # nvalid_ref : SMEM int32 [1]            number of real (inside) anchors
    # gt_ref     : SMEM f32   [B, 4*n_gt]    per-gt x1,y1,x2,y2 (zero rows = padding)
    # anchors_ref: VMEM f32   [8, TN]        rows 0..3 = x1,y1,x2,y2 (padded lanes = 0)
    # out_ref    : VMEM f32   [8, TN]        packed per-anchor results (pass-1 half)
    # gmax_ref   : VMEM f32   [G_rows, TN]   per-gt max-over-anchors accumulator
    b = pl.program_id(0)
    p = pl.program_id(1)          # 0: gt_max accumulation, 1: per-anchor outputs
    t = pl.program_id(2)
    n_tiles = pl.num_programs(2)
    tn = anchors_ref.shape[1]

    ax1 = anchors_ref[0:1, :]
    ay1 = anchors_ref[1:2, :]
    ax2 = anchors_ref[2:3, :]
    ay2 = anchors_ref[3:4, :]
    aw = ax2 - ax1 + 1.0
    ah = ay2 - ay1 + 1.0
    a_area = aw * ah

    lane = jax.lax.broadcasted_iota(jnp.int32, (1, tn), 1)
    valid = (t * tn + lane) < nvalid_ref[0]          # mask padded anchor lanes

    def iou_row(g):
        # gt coords as SMEM scalars -> free VPU splats (no lane broadcasts)
        gx1 = gt_ref[b, 4 * g + 0]
        gy1 = gt_ref[b, 4 * g + 1]
        gx2 = gt_ref[b, 4 * g + 2]
        gy2 = gt_ref[b, 4 * g + 3]
        gw = gx2 - gx1 + 1.0
        gh = gy2 - gy1 + 1.0
        g_area = gw * gh
        g_zero = jnp.logical_and(gw == 1.0, gh == 1.0)   # padded / zero gt row
        iw = jnp.maximum(jnp.minimum(ax2, gx2) - jnp.maximum(ax1, gx1) + 1.0, 0.0)
        ih = jnp.maximum(jnp.minimum(ay2, gy2) - jnp.maximum(ay1, gy1) + 1.0, 0.0)
        inter = iw * ih
        ua = a_area + g_area - inter
        # Exact divide kept on purpose: approx reciprocal (~1e-3 rel) could flip
        # anchors sitting exactly on the 0.3 / 0.7 thresholds vs. the reference.
        ov = inter / ua
        ov = jnp.where(g_zero, 0.0, ov)                  # reference: zero-gt -> 0
        return ov, gx1, gy1, gx2, gy2

    # ---- pass 0: accumulate per-gt max over anchors across tiles ---------------
    @pl.when(p == 0)
    def _pass0():
        @pl.when(t == 0)
        def _init():
            gmax_ref[...] = jnp.zeros_like(gmax_ref)

        for g in range(n_gt):                            # static unroll, small G
            ov, _, _, _, _ = iou_row(g)
            ovm = jnp.where(valid, ov, 0.0)              # exclude padded anchors
            gmax_ref[g:g + 1, :] = jnp.maximum(gmax_ref[g:g + 1, :], ovm)

        @pl.when(t == n_tiles - 1)
        def _finalize():
            m = jnp.max(gmax_ref[...], axis=1, keepdims=True)   # one XLU reduce / b
            m = jnp.where(m == 0.0, 1e-5, m)                    # reference guard
            gmax_ref[...] = jnp.broadcast_to(m, gmax_ref.shape)

    # ---- pass 1: per-anchor outputs (running-select over gt, VPU only) ---------
    @pl.when(p == 1)
    def _pass1():
        run_max = jnp.full((1, tn), -1.0, jnp.float32)
        run_arg = jnp.zeros((1, tn), jnp.float32)
        keep = jnp.zeros((1, tn), jnp.float32)
        mx1 = jnp.zeros((1, tn), jnp.float32)
        my1 = jnp.zeros((1, tn), jnp.float32)
        mx2 = jnp.zeros((1, tn), jnp.float32)
        my2 = jnp.zeros((1, tn), jnp.float32)
        for g in range(n_gt):
            ov, gx1, gy1, gx2, gy2 = iou_row(g)
            better = ov > run_max                        # first-occurrence ties
            run_max = jnp.where(better, ov, run_max)
            run_arg = jnp.where(better, jnp.float32(g), run_arg)
            mx1 = jnp.where(better, gx1, mx1)
            my1 = jnp.where(better, gy1, my1)
            mx2 = jnp.where(better, gx2, mx2)
            my2 = jnp.where(better, gy2, my2)
            keep = keep + (ov == gmax_ref[g:g + 1, :]).astype(jnp.float32)

        inv_aw = 1.0 / aw                                # reused for dx, dw
        inv_ah = 1.0 / ah
        ecx = ax1 + 0.5 * aw
        ecy = ay1 + 0.5 * ah
        tw = mx2 - mx1 + 1.0
        th = my2 - my1 + 1.0
        tcx = mx1 + 0.5 * tw
        tcy = my1 + 0.5 * th
        dx = (tcx - ecx) * inv_aw
        dy = (tcy - ecy) * inv_ah
        dw = jnp.log(tw * inv_aw)
        dh = jnp.log(th * inv_ah)

        # pre-thresholded labels (same assignment order as the reference)
        pos = jnp.logical_or(keep > 0.0, run_max >= pos_thr)
        if clobber:
            labels = jnp.where(pos, 1.0, -1.0)
            labels = jnp.where(run_max < neg_thr, 0.0, labels)
        else:
            labels = jnp.where(run_max < neg_thr, 0.0, -1.0)
            labels = jnp.where(pos, 1.0, labels)

        out_ref[0:1, :] = run_max
        out_ref[1:2, :] = run_arg
        out_ref[2:3, :] = keep
        out_ref[3:4, :] = dx
        out_ref[4:5, :] = dy
        out_ref[5:6, :] = dw
        out_ref[6:7, :] = dh
        out_ref[7:8, :] = labels


def compute_anchor_targets_pallas(anchors_cols, gt_flat, nvalid, *, n_gt, tn):
    # anchors_cols: [8, N_pad] f32, gt_flat: [B, 4*n_gt] f32, nvalid: [1] int32
    B = gt_flat.shape[0]
    n_pad = anchors_cols.shape[1]
    n_tiles = n_pad // tn
    g_rows = max(8, -(-n_gt // 8) * 8)
    kernel = functools.partial(_anchor_target_kernel, n_gt=n_gt,
                               clobber=RPN_CLOBBER_POSITIVES,
                               pos_thr=RPN_POSITIVE_OVERLAP,
                               neg_thr=RPN_NEGATIVE_OVERLAP)
    # TODO(synk): for the B==1 / v7x case, split the gt_max pass into its own
    # pallas_call so the anchor-tile axis can be marked "parallel" across cores.
    return pl.pallas_call(
        kernel,
        out_shape=jax.ShapeDtypeStruct((B, 2, 8, n_pad), jnp.float32),
        grid_spec=pltpu.PrefetchScalarGridSpec(
            num_scalar_prefetch=0,
            grid=(B, 2, n_tiles),
            in_specs=[
                pl.BlockSpec(memory_space=pltpu.MemorySpace.SMEM),     # nvalid
                pl.BlockSpec(memory_space=pltpu.MemorySpace.SMEM),     # gt_flat
                pl.BlockSpec((8, tn), lambda b, p, t: (0, t)),         # anchors
            ],
            out_specs=pl.BlockSpec((None, None, 8, tn),
                                   lambda b, p, t: (b, p, 0, t)),
            scratch_shapes=[pltpu.VMEM((g_rows, tn), jnp.float32)]),
        compiler_params=pltpu.CompilerParams(
            dimension_semantics=("parallel", "arbitrary", "arbitrary"),
            vmem_limit_bytes=32 * 1024 * 1024),
    )(nvalid, gt_flat, anchors_cols)


# ----------------------------- host-side helpers (cold path) -------------------
def _unmap_np(data, count, inds, batch_size, fill=0):
    if data.ndim == 2:
        ret = np.full((batch_size, count), fill, dtype=data.dtype)
        ret[:, inds] = data
    else:
        ret = np.full((batch_size, count, data.shape[2]), fill, dtype=data.dtype)
        ret[:, inds, :] = data
    return ret


def bbox_overlaps_np(boxes, query_boxes):
    if query_boxes.shape[0] == 0:
        return np.zeros((boxes.shape[0], 0), np.float32)
    bw = boxes[:, 2] - boxes[:, 0] + 1.0
    bh = boxes[:, 3] - boxes[:, 1] + 1.0
    qw = query_boxes[:, 2] - query_boxes[:, 0] + 1.0
    qh = query_boxes[:, 3] - query_boxes[:, 1] + 1.0
    iw = np.minimum(boxes[:, None, 2], query_boxes[None, :, 2]) - \
        np.maximum(boxes[:, None, 0], query_boxes[None, :, 0]) + 1.0
    ih = np.minimum(boxes[:, None, 3], query_boxes[None, :, 3]) - \
        np.maximum(boxes[:, None, 1], query_boxes[None, :, 1]) + 1.0
    iw = np.clip(iw, 0, None)
    ih = np.clip(ih, 0, None)
    inter = iw * ih
    ua = bw[:, None] * bh[:, None] + qw[None, :] * qh[None, :] - inter
    return (inter / ua).astype(np.float32)


def bbox_iog_np(boxes, query_boxes):
    # intersection-over-anchor-area; only consumed via `sum(...) == 0`.
    if query_boxes.shape[0] == 0:
        return np.zeros((boxes.shape[0], 0), np.float32)
    bw = boxes[:, 2] - boxes[:, 0] + 1.0
    bh = boxes[:, 3] - boxes[:, 1] + 1.0
    iw = np.minimum(boxes[:, None, 2], query_boxes[None, :, 2]) - \
        np.maximum(boxes[:, None, 0], query_boxes[None, :, 0]) + 1.0
    ih = np.minimum(boxes[:, None, 3], query_boxes[None, :, 3]) - \
        np.maximum(boxes[:, None, 1], query_boxes[None, :, 1]) + 1.0
    iw = np.clip(iw, 0, None)
    ih = np.clip(ih, 0, None)
    inter = iw * ih
    return (inter / (bw * bh)[:, None]).astype(np.float32)


# ----------------------------- forward pass -------------------------------------
def anchor_target_forward(rpn_cls_score, gt_boxes, im_info, num_boxes,
                          feat_stride, scales, ratios):
    rpn_cls_score = np.asarray(rpn_cls_score)
    gt_boxes_np = np.asarray(gt_boxes, dtype=np.float32)
    im_info_np = np.asarray(im_info, dtype=np.float32)

    anchors_base = generate_anchors(scales=np.array(scales, dtype=np.float64),
                                    ratios=np.array(ratios, dtype=np.float64))
    A = anchors_base.shape[0]
    allowed_border = 0

    B, Gmax, _ = gt_boxes_np.shape
    # split gt boxes into pedestrian / ignore / hard
    ped_boxes = np.zeros((B, Gmax, 5), np.float32)
    n_ignore = int((gt_boxes_np[:, :, 4] == 2).sum(axis=1).max())
    n_hard = int((gt_boxes_np[:, :, 4] == 3).sum(axis=1).max())
    ignore_boxes = np.zeros((B, n_ignore, 4), np.float32)
    hard_boxes = np.zeros((B, n_hard, 4), np.float32)
    for i in range(B):
        idx_h = 0
        idx_i = 0
        for j in range(Gmax):
            c = gt_boxes_np[i, j, 4]
            if c == 2:
                ignore_boxes[i, idx_i, :] = gt_boxes_np[i, j, :4]
                idx_i += 1
            elif c == 3:
                hard_boxes[i, idx_h, :] = gt_boxes_np[i, j, :4]
                idx_h += 1
            else:
                ped_boxes[i, j, :] = gt_boxes_np[i, j, :]

    height, width = rpn_cls_score.shape[2], rpn_cls_score.shape[3]
    batch_size = B

    shift_x = np.arange(0, width) * feat_stride
    shift_y = np.arange(0, height) * feat_stride
    sx, sy = np.meshgrid(shift_x, shift_y)
    shifts = np.vstack((sx.ravel(), sy.ravel(), sx.ravel(), sy.ravel())
                       ).transpose().astype(np.float32)
    K = shifts.shape[0]
    all_anchors = (anchors_base.reshape(1, A, 4) +
                   shifts.reshape(K, 1, 4)).reshape(K * A, 4).astype(np.float32)
    total_anchors = int(K * A)

    keep = ((all_anchors[:, 0] >= -allowed_border) &
            (all_anchors[:, 1] >= -allowed_border) &
            (all_anchors[:, 2] < int(im_info_np[0][1]) + allowed_border) &
            (all_anchors[:, 3] < int(im_info_np[0][0]) + allowed_border))
    inds_inside = np.nonzero(keep)[0]
    anchors = all_anchors[inds_inside, :]
    N = anchors.shape[0]

    # ---------------- Pallas hot path: tiled fused kernel -----------------------
    n_gt = max(1, Gmax)
    # 512 lanes at small N; 2048 lanes at production N (per v7x 64 MiB VMEM
    # guidance, 2048-4096-lane tiles keep >85% of roofline with small footprint).
    TN = 2048 if N > 2048 else 512
    N_pad = max(TN, int(np.ceil(max(N, 1) / TN)) * TN)
    anchors_cols = np.zeros((8, N_pad), np.float32)
    anchors_cols[0:4, :N] = anchors.T
    gt_flat = np.zeros((B, 4 * n_gt), np.float32)
    gt_flat[:, :4 * Gmax] = ped_boxes[:, :, :4].reshape(B, 4 * Gmax)
    nvalid = np.array([N], np.int32)

    packed = np.asarray(compute_anchor_targets_pallas(
        jnp.asarray(anchors_cols), jnp.asarray(gt_flat), jnp.asarray(nvalid),
        n_gt=n_gt, tn=TN))
    res = packed[:, 1]                                            # [B, 8, N_pad]
    labels = np.array(res[:, 7, :N], dtype=np.float32)            # [B, N]
    bbox_targets = np.ascontiguousarray(
        res[:, 3:7, :N].transpose(0, 2, 1)).astype(np.float32)    # [B, N, 4]

    bbox_inside_weights = np.zeros((batch_size, N), np.float32)
    bbox_outside_weights = np.zeros((batch_size, N), np.float32)

    num_fg = int(RPN_FG_FRACTION * RPN_BATCHSIZE)
    sum_fg = (labels == 1).sum(axis=1)
    sum_bg = (labels == 0).sum(axis=1)
    # TODO(synk): reference uses unseeded np.random.permutation for fg/bg
    # subsampling; a seeded RNG is used here for determinism.
    rng = np.random.RandomState(0)
    i = 0
    for i in range(batch_size):
        if sum_fg[i] > num_fg:
            fg_inds = np.nonzero(labels[i] == 1)[0]
            rand_num = rng.permutation(fg_inds.size).astype(np.int64)
            disable_inds = fg_inds[rand_num[:fg_inds.size - num_fg]]
            labels[i][disable_inds] = -1
        num_bg = RPN_BATCHSIZE - int((labels[i] == 1).sum())
        if sum_bg[i] > num_bg:
            bg_inds = np.nonzero(labels[i] == 0)[0]
            labels[i][bg_inds] = -1
            rand_num = rng.permutation(bg_inds.size).astype(np.int64)
            if hard_boxes[i].size != 1:
                hard_overlaps = bbox_overlaps_np(anchors[rand_num], hard_boxes[i])
                rand_num = rand_num[hard_overlaps.sum(axis=1) == 0]
            if ignore_boxes[i].size != 1:
                ignore_overlaps = bbox_iog_np(anchors[rand_num], ignore_boxes[i])
                rand_num = rand_num[ignore_overlaps.sum(axis=1) == 0]
            labels[i][rand_num[:num_bg]] = 0

    bbox_inside_weights[labels == 1] = RPN_BBOX_INSIDE_WEIGHTS[0]
    if RPN_POSITIVE_WEIGHT < 0:
        # bug-compatible with the reference: uses the stale loop variable `i`
        # (last batch) for num_examples, so normalization is not per-batch.
        num_examples = int((labels[i] >= 0).sum())
        positive_weights = 1.0 / num_examples
        negative_weights = 1.0 / num_examples
    else:
        assert (RPN_POSITIVE_WEIGHT > 0) & (RPN_POSITIVE_WEIGHT < 1)
        num_pos = max(int((labels[i] == 1).sum()), 1)
        num_neg = max(int((labels[i] == 0).sum()), 1)
        positive_weights = RPN_POSITIVE_WEIGHT / num_pos
        negative_weights = (1.0 - RPN_POSITIVE_WEIGHT) / num_neg
    bbox_outside_weights[labels == 1] = positive_weights
    bbox_outside_weights[labels == 0] = negative_weights

    labels_u = _unmap_np(labels, total_anchors, inds_inside, batch_size, fill=-1)
    bbox_targets_u = _unmap_np(bbox_targets, total_anchors, inds_inside,
                               batch_size, fill=0)
    biw_u = _unmap_np(bbox_inside_weights, total_anchors, inds_inside,
                      batch_size, fill=0)
    bow_u = _unmap_np(bbox_outside_weights, total_anchors, inds_inside,
                      batch_size, fill=0)

    labels_out = labels_u.reshape(batch_size, height, width, A) \
        .transpose(0, 3, 1, 2).reshape(batch_size, 1, A * height, width)
    bbox_targets_out = bbox_targets_u.reshape(batch_size, height, width, A * 4) \
        .transpose(0, 3, 1, 2)
    anchors_count = biw_u.shape[1]
    biw_out = np.tile(biw_u.reshape(batch_size, anchors_count, 1), (1, 1, 4)) \
        .reshape(batch_size, height, width, 4 * A).transpose(0, 3, 1, 2)
    bow_out = np.tile(bow_u.reshape(batch_size, anchors_count, 1), (1, 1, 4)) \
        .reshape(batch_size, height, width, 4 * A).transpose(0, 3, 1, 2)

    return [jnp.asarray(labels_out), jnp.asarray(bbox_targets_out),
            jnp.asarray(biw_out), jnp.asarray(bow_out)]


# ----------------------------- demo ---------------------------------------------
if __name__ == "__main__":
    key = jax.random.PRNGKey(0)
    feat_stride = 16
    scales = [2, 4, 8]
    ratios = [0.5, 1, 2]
    A = len(scales) * len(ratios)          # 9 anchors
    B, H, W = 2, 8, 8

    rpn_cls_score = jax.random.normal(key, (B, 2 * A, H, W), dtype=jnp.float32)
    gt_boxes = jnp.array([
        [[10., 20., 60., 90., 1.],
         [40., 30., 100., 110., 1.],
         [5., 5., 30., 40., 2.],        # ignore region
         [70., 60., 120., 120., 3.],    # hard example
         [0., 0., 0., 0., 0.]],
        [[16., 16., 80., 96., 1.],
         [50., 10., 110., 70., 1.],
         [20., 70., 60., 120., 1.],
         [0., 0., 0., 0., 0.],
         [0., 0., 0., 0., 0.]],
    ], dtype=jnp.float32)
    im_info = jnp.array([[H * feat_stride, W * feat_stride, 1.0]] * B,
                        dtype=jnp.float32)
    num_boxes = jnp.array([2, 3], dtype=jnp.int32)

    outputs = anchor_target_forward(rpn_cls_score, gt_boxes, im_info, num_boxes,
                                    feat_stride, scales, ratios)
    for o in outputs:
        jax.block_until_ready(o)
    assert outputs[0].shape == (B, 1, A * H, W)
    assert outputs[1].shape == (B, 4 * A, H, W)
    assert outputs[2].shape == (B, 4 * A, H, W)
    assert outputs[3].shape == (B, 4 * A, H, W)
    print("KERNEL_OK")
</pallas_src>

<mosaic_0001>
module attributes {stable_mosaic.version = 11 : i64} {
  func.func @_anchor_target_kernel(%arg0: i32, %arg1: i32, %arg2: i32, %arg3: memref<1xi32, #tpu.memory_space<smem>>, %arg4: memref<2x20xf32, #tpu.memory_space<smem>>, %arg5: memref<8x512xf32, #tpu.memory_space<vmem>>, %arg6: memref<1x1x8x512xf32, #tpu.memory_space<vmem>>, %arg7: memref<8x512xf32, #tpu.memory_space<vmem>>) attributes {dimension_semantics = [#tpu.dimension_semantics<parallel>, #tpu.dimension_semantics<arbitrary>, #tpu.dimension_semantics<arbitrary>], iteration_bounds = array<i64: 2, 2, 1>, scalar_prefetch = 0 : i64, scratch_operands = 1 : i64, tpu.core_type = #tpu.core_type<tc>, window_params = [{transform_indices = @transform_0, window_bounds = array<i64: 1>}, {transform_indices = @transform_1, window_bounds = array<i64: 2, 20>}, {transform_indices = @transform_2, window_bounds = array<i64: 8, 512>}, {transform_indices = @transform_3, window_bounds = array<i64: 1, 1, 8, 512>}]} {
    %c0 = arith.constant 0 : index
    %c0_0 = arith.constant 0 : index
    %0 = vector.load %arg5[%c0, %c0_0] : memref<8x512xf32, #tpu.memory_space<vmem>>, vector<1x512xf32>
    %c1 = arith.constant 1 : index
    %c0_1 = arith.constant 0 : index
    %1 = vector.load %arg5[%c1, %c0_1] : memref<8x512xf32, #tpu.memory_space<vmem>>, vector<1x512xf32>
    %c2 = arith.constant 2 : index
    %c0_2 = arith.constant 0 : index
    %2 = vector.load %arg5[%c2, %c0_2] : memref<8x512xf32, #tpu.memory_space<vmem>>, vector<1x512xf32>
    %c3 = arith.constant 3 : index
    %c0_3 = arith.constant 0 : index
    %3 = vector.load %arg5[%c3, %c0_3] : memref<8x512xf32, #tpu.memory_space<vmem>>, vector<1x512xf32>
    %4 = arith.subf %2, %0 : vector<1x512xf32>
    %cst = arith.constant 1.000000e+00 : f32
    %5 = vector.broadcast %cst : f32 to vector<1x512xf32>
    %6 = arith.addf %4, %5 : vector<1x512xf32>
    %7 = arith.subf %3, %1 : vector<1x512xf32>
    %cst_4 = arith.constant 1.000000e+00 : f32
    %8 = vector.broadcast %cst_4 : f32 to vector<1x512xf32>
    %9 = arith.addf %7, %8 : vector<1x512xf32>
    %10 = arith.mulf %6, %9 : vector<1x512xf32>
    %11 = tpu.iota {dimensions = array<i32: 1>} : vector<1x512xi32>
    %c512_i32 = arith.constant 512 : i32
    %12 = arith.muli %arg2, %c512_i32 : i32
    %13 = vector.broadcast %12 : i32 to vector<1x512xi32>
    %14 = arith.addi %13, %11 : vector<1x512xi32>
    %c0_5 = arith.constant 0 : index
    %15 = memref.load %arg3[%c0_5] : memref<1xi32, #tpu.memory_space<smem>>
    %16 = vector.broadcast %15 : i32 to vector<1x512xi32>
    %17 = arith.cmpi slt, %14, %16 : vector<1x512xi32>
    %c0_i32 = arith.constant 0 : i32
    %18 = arith.cmpi eq, %arg1, %c0_i32 : i32
    %19 = arith.extui %18 : i1 to i32
    %c0_i32_6 = arith.constant 0 : i32
    %20 = arith.cmpi ne, %19, %c0_i32_6 : i32
    scf.if %20 {
      %c0_i32_8 = arith.constant 0 : i32
      %24 = arith.cmpi eq, %arg2, %c0_i32_8 : i32
      %25 = arith.extui %24 : i1 to i32
      %c0_i32_9 = arith.constant 0 : i32
      %26 = arith.cmpi ne, %25, %c0_i32_9 : i32
      scf.if %26 {
        %cst_86 = arith.constant 0.000000e+00 : f32
        %260 = vector.broadcast %cst_86 : f32 to vector<8x512xf32>
        %c0_87 = arith.constant 0 : index
        %c0_88 = arith.constant 0 : index
        %261 = vector.load %arg7[%c0_87, %c0_88] : memref<8x512xf32, #tpu.memory_space<vmem>>, vector<8x512xf32>
        tpu.vector_store %arg7[%c0_87, %c0_88], %260 {strides = array<i32>} : memref<8x512xf32, #tpu.memory_space<vmem>>, vector<8x512xf32>,
      } else {
      }
      %27 = arith.index_cast %arg0 : i32 to index
      %c0_10 = arith.constant 0 : index
      %28 = memref.load %arg4[%27, %c0_10] : memref<2x20xf32, #tpu.memory_space<smem>>
      %29 = arith.index_cast %arg0 : i32 to index
      %c1_11 = arith.constant 1 : index
      %30 = memref.load %arg4[%29, %c1_11] : memref<2x20xf32, #tpu.memory_space<smem>>
      %31 = arith.index_cast %arg0 : i32 to index
      %c2_12 = arith.constant 2 : index
      %32 = memref.load %arg4[%31, %c2_12] : memref<2x20xf32, #tpu.memory_space<smem>>
      %33 = arith.index_cast %arg0 : i32 to index
      %c3_13 = arith.constant 3 : index
      %34 = memref.load %arg4[%33, %c3_13] : memref<2x20xf32, #tpu.memory_space<smem>>
      %35 = arith.subf %32, %28 : f32
      %cst_14 = arith.constant 1.000000e+00 : f32
      %36 = arith.addf %35, %cst_14 : f32
      %37 = arith.subf %34, %30 : f32
      %cst_15 = arith.constant 1.000000e+00 : f32
      %38 = arith.addf %37, %cst_15 : f32
      %39 = arith.mulf %36, %38 : f32
      %cst_16 = arith.constant 1.000000e+00 : f32
      %40 = arith.cmpf oeq, %36, %cst_16 : f32
      %cst_17 = arith.constant 1.000000e+00 : f32
      %41 = arith.cmpf oeq, %38, %cst_17 : f32
      %42 = arith.andi %40, %41 : i1
      %43 = vector.broadcast %32 : f32 to vector<1x512xf32>
      %44 = arith.minimumf %2, %43 : vector<1x512xf32>
      %45 = vector.broadcast %28 : f32 to vector<1x512xf32>
      %46 = arith.maximumf %0, %45 : vector<1x512xf32>
      %47 = arith.subf %44, %46 : vector<1x512xf32>
      %cst_18 = arith.constant 1.000000e+00 : f32
      %48 = vector.broadcast %cst_18 : f32 to vector<1x512xf32>
      %49 = arith.addf %47, %48 : vector<1x512xf32>
      %cst_19 = arith.constant 0.000000e+00 : f32
      %50 = vector.broadcast %cst_19 : f32 to vector<1x512xf32>
      %51 = arith.maximumf %49, %50 : vector<1x512xf32>
      %52 = vector.broadcast %34 : f32 to vector<1x512xf32>
      %53 = arith.minimumf %3, %52 : vector<1x512xf32>
      %54 = vector.broadcast %30 : f32 to vector<1x512xf32>
      %55 = arith.maximumf %1, %54 : vector<1x512xf32>
      %56 = arith.subf %53, %55 : vector<1x512xf32>
      %cst_20 = arith.constant 1.000000e+00 : f32
      %57 = vector.broadcast %cst_20 : f32 to vector<1x512xf32>
      %58 = arith.addf %56, %57 : vector<1x512xf32>
      %cst_21 = arith.constant 0.000000e+00 : f32
      %59 = vector.broadcast %cst_21 : f32 to vector<1x512xf32>
      %60 = arith.maximumf %58, %59 : vector<1x512xf32>
      %61 = arith.mulf %51, %60 : vector<1x512xf32>
      %62 = vector.broadcast %39 : f32 to vector<1x512xf32>
      %63 = arith.addf %10, %62 : vector<1x512xf32>
      %64 = arith.subf %63, %61 : vector<1x512xf32>
      %65 = arith.divf %61, %64 : vector<1x512xf32>
      %cst_22 = arith.constant 0.000000e+00 : f32
      %66 = vector.broadcast %cst_22 : f32 to vector<1x512xf32>
      %67 = arith.select %42, %66, %65 : vector<1x512xf32>
      %cst_23 = arith.constant 0.000000e+00 : f32
      %68 = vector.broadcast %cst_23 : f32 to vector<1x512xf32>
      %69 = arith.select %17, %67, %68 : vector<1x512xi1>, vector<1x512xf32>
      %c0_24 = arith.constant 0 : index
      %c0_25 = arith.constant 0 : index
      %70 = vector.load %arg7[%c0_24, %c0_25] : memref<8x512xf32, #tpu.memory_space<vmem>>, vector<1x512xf32>
      %71 = arith.maximumf %70, %69 : vector<1x512xf32>
      %c0_26 = arith.constant 0 : index
      %c0_27 = arith.constant 0 : index
      %72 = vector.load %arg7[%c0_26, %c0_27] : memref<8x512xf32, #tpu.memory_space<vmem>>, vector<1x512xf32>
      tpu.vector_store %arg7[%c0_26, %c0_27], %71 {strides = array<i32>} : memref<8x512xf32, #tpu.memory_space<vmem>>, vector<1x512xf32>,
      %73 = arith.index_cast %arg0 : i32 to index
      %c4 = arith.constant 4 : index
      %74 = memref.load %arg4[%73, %c4] : memref<2x20xf32, #tpu.memory_space<smem>>
      %75 = arith.index_cast %arg0 : i32 to index
      %c5 = arith.constant 5 : index
      %76 = memref.load %arg4[%75, %c5] : memref<2x20xf32, #tpu.memory_space<smem>>
      %77 = arith.index_cast %arg0 : i32 to index
      %c6 = arith.constant 6 : index
      %78 = memref.load %arg4[%77, %c6] : memref<2x20xf32, #tpu.memory_space<smem>>
      %79 = arith.index_cast %arg0 : i32 to index
      %c7 = arith.constant 7 : index
      %80 = memref.load %arg4[%79, %c7] : memref<2x20xf32, #tpu.memory_space<smem>>
      %81 = arith.subf %78, %74 : f32
      %cst_28 = arith.constant 1.000000e+00 : f32
      %82 = arith.addf %81, %cst_28 : f32
      %83 = arith.subf %80, %76 : f32
      %cst_29 = arith.constant 1.000000e+00 : f32
      %84 = arith.addf %83, %cst_29 : f32
      %85 = arith.mulf %82, %84 : f32
      %cst_30 = arith.constant 1.000000e+00 : f32
      %86 = arith.cmpf oeq, %82, %cst_30 : f32
      %cst_31 = arith.constant 1.000000e+00 : f32
      %87 = arith.cmpf oeq, %84, %cst_31 : f32
      %88 = arith.andi %86, %87 : i1
      %89 = vector.broadcast %78 : f32 to vector<1x512xf32>
      %90 = arith.minimumf %2, %89 : vector<1x512xf32>
      %91 = vector.broadcast %74 : f32 to vector<1x512xf32>
      %92 = arith.maximumf %0, %91 : vector<1x512xf32>
      %93 = arith.subf %90, %92 : vector<1x512xf32>
      %cst_32 = arith.constant 1.000000e+00 : f32
      %94 = vector.broadcast %cst_32 : f32 to vector<1x512xf32>
      %95 = arith.addf %93, %94 : vector<1x512xf32>
      %cst_33 = arith.constant 0.000000e+00 : f32
      %96 = vector.broadcast %cst_33 : f32 to vector<1x512xf32>
      %97 = arith.maximumf %95, %96 : vector<1x512xf32>
      %98 = vector.broadcast %80 : f32 to vector<1x512xf32>
      %99 = arith.minimumf %3, %98 : vector<1x512xf32>
      %100 = vector.broadcast %76 : f32 to vector<1x512xf32>
      %101 = arith.maximumf %1, %100 : vector<1x512xf32>
      %102 = arith.subf %99, %101 : vector<1x512xf32>
      %cst_34 = arith.constant 1.000000e+00 : f32
      %103 = vector.broadcast %cst_34 : f32 to vector<1x512xf32>
      %104 = arith.addf %102, %103 : vector<1x512xf32>
      %cst_35 = arith.constant 0.000000e+00 : f32
      %105 = vector.broadcast %cst_35 : f32 to vector<1x512xf32>
      %106 = arith.maximumf %104, %105 : vector<1x512xf32>
      %107 = arith.mulf %97, %106 : vector<1x512xf32>
      %108 = vector.broadcast %85 : f32 to vector<1x512xf32>
      %109 = arith.addf %10, %108 : vector<1x512xf32>
      %110 = arith.subf %109, %107 : vector<1x512xf32>
      %111 = arith.divf %107, %110 : vector<1x512xf32>
      %cst_36 = arith.constant 0.000000e+00 : f32
      %112 = vector.broadcast %cst_36 : f32 to vector<1x512xf32>
      %113 = arith.select %88, %112, %111 : vector<1x512xf32>
      %cst_37 = arith.constant 0.000000e+00 : f32
      %114 = vector.broadcast %cst_37 : f32 to vector<1x512xf32>
      %115 = arith.select %17, %113, %114 : vector<1x512xi1>, vector<1x512xf32>
      %c1_38 = arith.constant 1 : index
      %c0_39 = arith.constant 0 : index
      %116 = vector.load %arg7[%c1_38, %c0_39] : memref<8x512xf32, #tpu.memory_space<vmem>>, vector<1x512xf32>
      %117 = arith.maximumf %116, %115 : vector<1x512xf32>
      %c1_40 = arith.constant 1 : index
      %c0_41 = arith.constant 0 : index
      %118 = vector.load %arg7[%c1_40, %c0_41] : memref<8x512xf32, #tpu.memory_space<vmem>>, vector<1x512xf32>
      tpu.vector_store %arg7[%c1_40, %c0_41], %117 {strides = array<i32>} : memref<8x512xf32, #tpu.memory_space<vmem>>, vector<1x512xf32>,
      %119 = arith.index_cast %arg0 : i32 to index
      %c8 = arith.constant 8 : index
      %120 = memref.load %arg4[%119, %c8] : memref<2x20xf32, #tpu.memory_space<smem>>
      %121 = arith.index_cast %arg0 : i32 to index
      %c9 = arith.constant 9 : index
      %122 = memref.load %arg4[%121, %c9] : memref<2x20xf32, #tpu.memory_space<smem>>
      %123 = arith.index_cast %arg0 : i32 to index
      %c10 = arith.constant 10 : index
      %124 = memref.load %arg4[%123, %c10] : memref<2x20xf32, #tpu.memory_space<smem>>
      %125 = arith.index_cast %arg0 : i32 to index
      %c11 = arith.constant 11 : index
      %126 = memref.load %arg4[%125, %c11] : memref<2x20xf32, #tpu.memory_space<smem>>
      %127 = arith.subf %124, %120 : f32
      %cst_42 = arith.constant 1.000000e+00 : f32
      %128 = arith.addf %127, %cst_42 : f32
      %129 = arith.subf %126, %122 : f32
      %cst_43 = arith.constant 1.000000e+00 : f32
      %130 = arith.addf %129, %cst_43 : f32
      %131 = arith.mulf %128, %130 : f32
      %cst_44 = arith.constant 1.000000e+00 : f32
      %132 = arith.cmpf oeq, %128, %cst_44 : f32
      %cst_45 = arith.constant 1.000000e+00 : f32
      %133 = arith.cmpf oeq, %130, %cst_45 : f32
      %134 = arith.andi %132, %133 : i1
      %135 = vector.broadcast %124 : f32 to vector<1x512xf32>
      %136 = arith.minimumf %2, %135 : vector<1x512xf32>
      %137 = vector.broadcast %120 : f32 to vector<1x512xf32>
      %138 = arith.maximumf %0, %137 : vector<1x512xf32>
      %139 = arith.subf %136, %138 : vector<1x512xf32>
      %cst_46 = arith.constant 1.000000e+00 : f32
      %140 = vector.broadcast %cst_46 : f32 to vector<1x512xf32>
      %141 = arith.addf %139, %140 : vector<1x512xf32>
      %cst_47 = arith.constant 0.000000e+00 : f32
      %142 = vector.broadcast %cst_47 : f32 to vector<1x512xf32>
      %143 = arith.maximumf %141, %142 : vector<1x512xf32>
      %144 = vector.broadcast %126 : f32 to vector<1x512xf32>
      %145 = arith.minimumf %3, %144 : vector<1x512xf32>
      %146 = vector.broadcast %122 : f32 to vector<1x512xf32>
      %147 = arith.maximumf %1, %146 : vector<1x512xf32>
      %148 = arith.subf %145, %147 : vector<1x512xf32>
      %cst_48 = arith.constant 1.000000e+00 : f32
      %149 = vector.broadcast %cst_48 : f32 to vector<1x512xf32>
      %150 = arith.addf %148, %149 : vector<1x512xf32>
      %cst_49 = arith.constant 0.000000e+00 : f32
      %151 = vector.broadcast %cst_49 : f32 to vector<1x512xf32>
      %152 = arith.maximumf %150, %151 : vector<1x512xf32>
      %153 = arith.mulf %143, %152 : vector<1x512xf32>
      %154 = vector.broadcast %131 : f32 to vector<1x512xf32>
      %155 = arith.addf %10, %154 : vector<1x512xf32>
      %156 = arith.subf %155, %153 : vector<1x512xf32>
      %157 = arith.divf %153, %156 : vector<1x512xf32>
      %cst_50 = arith.constant 0.000000e+00 : f32
      %158 = vector.broadcast %cst_50 : f32 to vector<1x512xf32>
      %159 = arith.select %134, %158, %157 : vector<1x512xf32>
      %cst_51 = arith.constant 0.000000e+00 : f32
      %160 = vector.broadcast %cst_51 : f32 to vector<1x512xf32>
      %161 = arith.select %17, %159, %160 : vector<1x512xi1>, vector<1x512xf32>
      %c2_52 = arith.constant 2 : index
      %c0_53 = arith.constant 0 : index
      %162 = vector.load %arg7[%c2_52, %c0_53] : memref<8x512xf32, #tpu.memory_space<vmem>>, vector<1x512xf32>
      %163 = arith.maximumf %162, %161 : vector<1x512xf32>
      %c2_54 = arith.constant 2 : index
      %c0_55 = arith.constant 0 : index
      %164 = vector.load %arg7[%c2_54, %c0_55] : memref<8x512xf32, #tpu.memory_space<vmem>>, vector<1x512xf32>
      tpu.vector_store %arg7[%c2_54, %c0_55], %163 {strides = array<i32>} : memref<8x512xf32, #tpu.memory_space<vmem>>, vector<1x512xf32>,
      %165 = arith.index_cast %arg0 : i32 to index
      %c12 = arith.constant 12 : index
      %166 = memref.load %arg4[%165, %c12] : memref<2x20xf32, #tpu.memory_space<smem>>
      %167 = arith.index_cast %arg0 : i32 to index
      %c13 = arith.constant 13 : index
      %168 = memref.load %arg4[%167, %c13] : memref<2x20xf32, #tpu.memory_space<smem>>
      %169 = arith.index_cast %arg0 : i32 to index
      %c14 = arith.constant 14 : index
      %170 = memref.load %arg4[%169, %c14] : memref<2x20xf32, #tpu.memory_space<smem>>
      %171 = arith.index_cast %arg0 : i32 to index
      %c15 = arith.constant 15 : index
      %172 = memref.load %arg4[%171, %c15] : memref<2x20xf32, #tpu.memory_space<smem>>
      %173 = arith.subf %170, %166 : f32
      %cst_56 = arith.constant 1.000000e+00 : f32
      %174 = arith.addf %173, %cst_56 : f32
      %175 = arith.subf %172, %168 : f32
      %cst_57 = arith.constant 1.000000e+00 : f32
      %176 = arith.addf %175, %cst_57 : f32
      %177 = arith.mulf %174, %176 : f32
      %cst_58 = arith.constant 1.000000e+00 : f32
      %178 = arith.cmpf oeq, %174, %cst_58 : f32
      %cst_59 = arith.constant 1.000000e+00 : f32
      %179 = arith.cmpf oeq, %176, %cst_59 : f32
      %180 = arith.andi %178, %179 : i1
      %181 = vector.broadcast %170 : f32 to vector<1x512xf32>
      %182 = arith.minimumf %2, %181 : vector<1x512xf32>
      %183 = vector.broadcast %166 : f32 to vector<1x512xf32>
      %184 = arith.maximumf %0, %183 : vector<1x512xf32>
      %185 = arith.subf %182, %184 : vector<1x512xf32>
      %cst_60 = arith.constant 1.000000e+00 : f32
      %186 = vector.broadcast %cst_60 : f32 to vector<1x512xf32>
      %187 = arith.addf %185, %186 : vector<1x512xf32>
      %cst_61 = arith.constant 0.000000e+00 : f32
      %188 = vector.broadcast %cst_61 : f32 to vector<1x512xf32>
      %189 = arith.maximumf %187, %188 : vector<1x512xf32>
      %190 = vector.broadcast %172 : f32 to vector<1x512xf32>
      %191 = arith.minimumf %3, %190 : vector<1x512xf32>
      %192 = vector.broadcast %168 : f32 to vector<1x512xf32>
      %193 = arith.maximumf %1, %192 : vector<1x512xf32>
      %194 = arith.subf %191, %193 : vector<1x512xf32>
      %cst_62 = arith.constant 1.000000e+00 : f32
      %195 = vector.broadcast %cst_62 : f32 to vector<1x512xf32>
      %196 = arith.addf %194, %195 : vector<1x512xf32>
      %cst_63 = arith.constant 0.000000e+00 : f32
      %197 = vector.broadcast %cst_63 : f32 to vector<1x512xf32>
      %198 = arith.maximumf %196, %197 : vector<1x512xf32>
      %199 = arith.mulf %189, %198 : vector<1x512xf32>
      %200 = vector.broadcast %177 : f32 to vector<1x512xf32>
      %201 = arith.addf %10, %200 : vector<1x512xf32>
      %202 = arith.subf %201, %199 : vector<1x512xf32>
      %203 = arith.divf %199, %202 : vector<1x512xf32>
      %cst_64 = arith.constant 0.000000e+00 : f32
      %204 = vector.broadcast %cst_64 : f32 to vector<1x512xf32>
      %205 = arith.select %180, %204, %203 : vector<1x512xf32>
      %cst_65 = arith.constant 0.000000e+00 : f32
      %206 = vector.broadcast %cst_65 : f32 to vector<1x512xf32>
      %207 = arith.select %17, %205, %206 : vector<1x512xi1>, vector<1x512xf32>
      %c3_66 = arith.constant 3 : index
      %c0_67 = arith.constant 0 : index
      %208 = vector.load %arg7[%c3_66, %c0_67] : memref<8x512xf32, #tpu.memory_space<vmem>>, vector<1x512xf32>
      %209 = arith.maximumf %208, %207 : vector<1x512xf32>
      %c3_68 = arith.constant 3 : index
      %c0_69 = arith.constant 0 : index
      %210 = vector.load %arg7[%c3_68, %c0_69] : memref<8x512xf32, #tpu.memory_space<vmem>>, vector<1x512xf32>
      tpu.vector_store %arg7[%c3_68, %c0_69], %209 {strides = array<i32>} : memref<8x512xf32, #tpu.memory_space<vmem>>, vector<1x512xf32>,
      %211 = arith.index_cast %arg0 : i32 to index
      %c16 = arith.constant 16 : index
      %212 = memref.load %arg4[%211, %c16] : memref<2x20xf32, #tpu.memory_space<smem>>
      %213 = arith.index_cast %arg0 : i32 to index
      %c17 = arith.constant 17 : index
      %214 = memref.load %arg4[%213, %c17] : memref<2x20xf32, #tpu.memory_space<smem>>
      %215 = arith.index_cast %arg0 : i32 to index
      %c18 = arith.constant 18 : index
      %216 = memref.load %arg4[%215, %c18] : memref<2x20xf32, #tpu.memory_space<smem>>
      %217 = arith.index_cast %arg0 : i32 to index
      %c19 = arith.constant 19 : index
      %218 = memref.load %arg4[%217, %c19] : memref<2x20xf32, #tpu.memory_space<smem>>
      %219 = arith.subf %216, %212 : f32
      %cst_70 = arith.constant 1.000000e+00 : f32
      %220 = arith.addf %219, %cst_70 : f32
      %221 = arith.subf %218, %214 : f32
      %cst_71 = arith.constant 1.000000e+00 : f32
      %222 = arith.addf %221, %cst_71 : f32
      %223 = arith.mulf %220, %222 : f32
      %cst_72 = arith.constant 1.000000e+00 : f32
      %224 = arith.cmpf oeq, %220, %cst_72 : f32
      %cst_73 = arith.constant 1.000000e+00 : f32
      %225 = arith.cmpf oeq, %222, %cst_73 : f32
      %226 = arith.andi %224, %225 : i1
      %227 = vector.broadcast %216 : f32 to vector<1x512xf32>
      %228 = arith.minimumf %2, %227 : vector<1x512xf32>
      %229 = vector.broadcast %212 : f32 to vector<1x512xf32>
      %230 = arith.maximumf %0, %229 : vector<1x512xf32>
      %231 = arith.subf %228, %230 : vector<1x512xf32>
      %cst_74 = arith.constant 1.000000e+00 : f32
      %232 = vector.broadcast %cst_74 : f32 to vector<1x512xf32>
      %233 = arith.addf %231, %232 : vector<1x512xf32>
      %cst_75 = arith.constant 0.000000e+00 : f32
      %234 = vector.broadcast %cst_75 : f32 to vector<1x512xf32>
      %235 = arith.maximumf %233, %234 : vector<1x512xf32>
      %236 = vector.broadcast %218 : f32 to vector<1x512xf32>
      %237 = arith.minimumf %3, %236 : vector<1x512xf32>
      %238 = vector.broadcast %214 : f32 to vector<1x512xf32>
      %239 = arith.maximumf %1, %238 : vector<1x512xf32>
      %240 = arith.subf %237, %239 : vector<1x512xf32>
      %cst_76 = arith.constant 1.000000e+00 : f32
      %241 = vector.broadcast %cst_76 : f32 to vector<1x512xf32>
      %242 = arith.addf %240, %241 : vector<1x512xf32>
      %cst_77 = arith.constant 0.000000e+00 : f32
      %243 = vector.broadcast %cst_77 : f32 to vector<1x512xf32>
      %244 = arith.maximumf %242, %243 : vector<1x512xf32>
      %245 = arith.mulf %235, %244 : vector<1x512xf32>
      %246 = vector.broadcast %223 : f32 to vector<1x512xf32>
      %247 = arith.addf %10, %246 : vector<1x512xf32>
      %248 = arith.subf %247, %245 : vector<1x512xf32>
      %249 = arith.divf %245, %248 : vector<1x512xf32>
      %cst_78 = arith.constant 0.000000e+00 : f32
      %250 = vector.broadcast %cst_78 : f32 to vector<1x512xf32>
      %251 = arith.select %226, %250, %249 : vector<1x512xf32>
      %cst_79 = arith.constant 0.000000e+00 : f32
      %252 = vector.broadcast %cst_79 : f32 to vector<1x512xf32>
      %253 = arith.select %17, %251, %252 : vector<1x512xi1>, vector<1x512xf32>
      %c4_80 = arith.constant 4 : index
      %c0_81 = arith.constant 0 : index
      %254 = vector.load %arg7[%c4_80, %c0_81] : memref<8x512xf32, #tpu.memory_space<vmem>>, vector<1x512xf32>
      %255 = arith.maximumf %254, %253 : vector<1x512xf32>
      %c4_82 = arith.constant 4 : index
      %c0_83 = arith.constant 0 : index
      %256 = vector.load %arg7[%c4_82, %c0_83] : memref<8x512xf32, #tpu.memory_space<vmem>>, vector<1x512xf32>
      tpu.vector_store %arg7[%c4_82, %c0_83], %255 {strides = array<i32>} : memref<8x512xf32, #tpu.memory_space<vmem>>, vector<1x512xf32>,
      %c0_i32_84 = arith.constant 0 : i32
      %257 = arith.cmpi eq, %arg2, %c0_i32_84 : i32
      %258 = arith.extui %257 : i1 to i32
      %c0_i32_85 = arith.constant 0 : i32
      %259 = arith.cmpi ne, %258, %c0_i32_85 : i32
      scf.if %259 {
        %c0_86 = arith.constant 0 : index
        %c0_87 = arith.constant 0 : index
        %260 = vector.load %arg7[%c0_86, %c0_87] : memref<8x512xf32, #tpu.memory_space<vmem>>, vector<8x512xf32>
        %cst_88 = arith.constant dense<0xFF800000> : vector<8xf32>
        %261 = vector.multi_reduction <maximumf>, %260, %cst_88 [1] : vector<8x512xf32> to vector<8xf32>
        %262 = vector.shape_cast %261 : vector<8xf32> to vector<8x1xf32>
        %cst_89 = arith.constant 0.000000e+00 : f32
        %263 = vector.broadcast %cst_89 : f32 to vector<8x1xf32>
        %264 = arith.cmpf oeq, %262, %263 : vector<8x1xf32>
        %cst_90 = arith.constant 9.99999974E-6 : f32
        %265 = vector.broadcast %cst_90 : f32 to vector<8x1xf32>
        %266 = arith.select %264, %265, %262 : vector<8x1xi1>, vector<8x1xf32>
        %267 = vector.shape_cast %266 : vector<8x1xf32> to vector<8x1xf32>
        %268 = vector.broadcast %267 : vector<8x1xf32> to vector<8x512xf32>
        %c0_91 = arith.constant 0 : index
        %c0_92 = arith.constant 0 : index
        %269 = vector.load %arg7[%c0_91, %c0_92] : memref<8x512xf32, #tpu.memory_space<vmem>>, vector<8x512xf32>
        tpu.vector_store %arg7[%c0_91, %c0_92], %268 {strides = array<i32>} : memref<8x512xf32, #tpu.memory_space<vmem>>, vector<8x512xf32>,
      } else {
      }
    } else {
    }
    %c1_i32 = arith.constant 1 : i32
    %21 = arith.cmpi eq, %arg1, %c1_i32 : i32
    %22 = arith.extui %21 : i1 to i32
    %c0_i32_7 = arith.constant 0 : i32
    %23 = arith.cmpi ne, %22, %c0_i32_7 : i32
    scf.if %23 {
      %cst_8 = arith.constant -1.000000e+00 : f32
      %24 = vector.broadcast %cst_8 : f32 to vector<1x512xf32>
      %cst_9 = arith.constant 0.000000e+00 : f32
      %25 = vector.broadcast %cst_9 : f32 to vector<1x512xf32>
      %cst_10 = arith.constant 0.000000e+00 : f32
      %26 = vector.broadcast %cst_10 : f32 to vector<1x512xf32>
      %cst_11 = arith.constant 0.000000e+00 : f32
      %27 = vector.broadcast %cst_11 : f32 to vector<1x512xf32>
      %cst_12 = arith.constant 0.000000e+00 : f32
      %28 = vector.broadcast %cst_12 : f32 to vector<1x512xf32>
      %cst_13 = arith.constant 0.000000e+00 : f32
      %29 = vector.broadcast %cst_13 : f32 to vector<1x512xf32>
      %cst_14 = arith.constant 0.000000e+00 : f32
      %30 = vector.broadcast %cst_14 : f32 to vector<1x512xf32>
      %31 = arith.index_cast %arg0 : i32 to index
      %c0_15 = arith.constant 0 : index
      %32 = memref.load %arg4[%31, %c0_15] : memref<2x20xf32, #tpu.memory_space<smem>>
      %33 = arith.index_cast %arg0 : i32 to index
      %c1_16 = arith.constant 1 : index
      %34 = memref.load %arg4[%33, %c1_16] : memref<2x20xf32, #tpu.memory_space<smem>>
      %35 = arith.index_cast %arg0 : i32 to index
      %c2_17 = arith.constant 2 : index
      %36 = memref.load %arg4[%35, %c2_17] : memref<2x20xf32, #tpu.memory_space<smem>>
      %37 = arith.index_cast %arg0 : i32 to index
      %c3_18 = arith.constant 3 : index
      %38 = memref.load %arg4[%37, %c3_18] : memref<2x20xf32, #tpu.memory_space<smem>>
      %39 = arith.subf %36, %32 : f32
      %cst_19 = arith.constant 1.000000e+00 : f32
      %40 = arith.addf %39, %cst_19 : f32
      %41 = arith.subf %38, %34 : f32
      %cst_20 = arith.constant 1.000000e+00 : f32
      %42 = arith.addf %41, %cst_20 : f32
      %43 = arith.mulf %40, %42 : f32
      %cst_21 = arith.constant 1.000000e+00 : f32
      %44 = arith.cmpf oeq, %40, %cst_21 : f32
      %cst_22 = arith.constant 1.000000e+00 : f32
      %45 = arith.cmpf oeq, %42, %cst_22 : f32
      %46 = arith.andi %44, %45 : i1
      %47 = vector.broadcast %36 : f32 to vector<1x512xf32>
      %48 = arith.minimumf %2, %47 : vector<1x512xf32>
      %49 = vector.broadcast %32 : f32 to vector<1x512xf32>
      %50 = arith.maximumf %0, %49 : vector<1x512xf32>
      %51 = arith.subf %48, %50 : vector<1x512xf32>
      %cst_23 = arith.constant 1.000000e+00 : f32
      %52 = vector.broadcast %cst_23 : f32 to vector<1x512xf32>
      %53 = arith.addf %51, %52 : vector<1x512xf32>
      %cst_24 = arith.constant 0.000000e+00 : f32
      %54 = vector.broadcast %cst_24 : f32 to vector<1x512xf32>
      %55 = arith.maximumf %53, %54 : vector<1x512xf32>
      %56 = vector.broadcast %38 : f32 to vector<1x512xf32>
      %57 = arith.minimumf %3, %56 : vector<1x512xf32>
      %58 = vector.broadcast %34 : f32 to vector<1x512xf32>
      %59 = arith.maximumf %1, %58 : vector<1x512xf32>
      %60 = arith.subf %57, %59 : vector<1x512xf32>
      %cst_25 = arith.constant 1.000000e+00 : f32
      %61 = vector.broadcast %cst_25 : f32 to vector<1x512xf32>
      %62 = arith.addf %60, %61 : vector<1x512xf32>
      %cst_26 = arith.constant 0.000000e+00 : f32
      %63 = vector.broadcast %cst_26 : f32 to vector<1x512xf32>
      %64 = arith.maximumf %62, %63 : vector<1x512xf32>
      %65 = arith.mulf %55, %64 : vector<1x512xf32>
      %66 = vector.broadcast %43 : f32 to vector<1x512xf32>
      %67 = arith.addf %10, %66 : vector<1x512xf32>
      %68 = arith.subf %67, %65 : vector<1x512xf32>
      %69 = arith.divf %65, %68 : vector<1x512xf32>
      %cst_27 = arith.constant 0.000000e+00 : f32
      %70 = vector.broadcast %cst_27 : f32 to vector<1x512xf32>
      %71 = arith.select %46, %70, %69 : vector<1x512xf32>
      %72 = arith.cmpf ogt, %71, %24 : vector<1x512xf32>
      %73 = arith.select %72, %71, %24 : vector<1x512xi1>, vector<1x512xf32>
      %cst_28 = arith.constant 0.000000e+00 : f32
      %74 = vector.broadcast %cst_28 : f32 to vector<1x512xf32>
      %75 = arith.select %72, %74, %25 : vector<1x512xi1>, vector<1x512xf32>
      %76 = vector.broadcast %32 : f32 to vector<1x512xf32>
      %77 = arith.select %72, %76, %27 : vector<1x512xi1>, vector<1x512xf32>
      %78 = vector.broadcast %34 : f32 to vector<1x512xf32>
      %79 = arith.select %72, %78, %28 : vector<1x512xi1>, vector<1x512xf32>
      %80 = vector.broadcast %36 : f32 to vector<1x512xf32>
      %81 = arith.select %72, %80, %29 : vector<1x512xi1>, vector<1x512xf32>
      %82 = vector.broadcast %38 : f32 to vector<1x512xf32>
      %83 = arith.select %72, %82, %30 : vector<1x512xi1>, vector<1x512xf32>
      %c0_29 = arith.constant 0 : index
      %c0_30 = arith.constant 0 : index
      %84 = vector.load %arg7[%c0_29, %c0_30] : memref<8x512xf32, #tpu.memory_space<vmem>>, vector<1x512xf32>
      %85 = arith.cmpf oeq, %71, %84 : vector<1x512xf32>
      %86 = arith.extui %85 : vector<1x512xi1> to vector<1x512xi32>
      %87 = arith.sitofp %86 : vector<1x512xi32> to vector<1x512xf32>
      %88 = arith.addf %26, %87 : vector<1x512xf32>
      %89 = arith.index_cast %arg0 : i32 to index
      %c4 = arith.constant 4 : index
      %90 = memref.load %arg4[%89, %c4] : memref<2x20xf32, #tpu.memory_space<smem>>
      %91 = arith.index_cast %arg0 : i32 to index
      %c5 = arith.constant 5 : index
      %92 = memref.load %arg4[%91, %c5] : memref<2x20xf32, #tpu.memory_space<smem>>
      %93 = arith.index_cast %arg0 : i32 to index
      %c6 = arith.constant 6 : index
      %94 = memref.load %arg4[%93, %c6] : memref<2x20xf32, #tpu.memory_space<smem>>
      %95 = arith.index_cast %arg0 : i32 to index
      %c7 = arith.constant 7 : index
      %96 = memref.load %arg4[%95, %c7] : memref<2x20xf32, #tpu.memory_space<smem>>
      %97 = arith.subf %94, %90 : f32
      %cst_31 = arith.constant 1.000000e+00 : f32
      %98 = arith.addf %97, %cst_31 : f32
      %99 = arith.subf %96, %92 : f32
      %cst_32 = arith.constant 1.000000e+00 : f32
      %100 = arith.addf %99, %cst_32 : f32
      %101 = arith.mulf %98, %100 : f32
      %cst_33 = arith.constant 1.000000e+00 : f32
      %102 = arith.cmpf oeq, %98, %cst_33 : f32
      %cst_34 = arith.constant 1.000000e+00 : f32
      %103 = arith.cmpf oeq, %100, %cst_34 : f32
      %104 = arith.andi %102, %103 : i1
      %105 = vector.broadcast %94 : f32 to vector<1x512xf32>
      %106 = arith.minimumf %2, %105 : vector<1x512xf32>
      %107 = vector.broadcast %90 : f32 to vector<1x512xf32>
      %108 = arith.maximumf %0, %107 : vector<1x512xf32>
      %109 = arith.subf %106, %108 : vector<1x512xf32>
      %cst_35 = arith.constant 1.000000e+00 : f32
      %110 = vector.broadcast %cst_35 : f32 to vector<1x512xf32>
      %111 = arith.addf %109, %110 : vector<1x512xf32>
      %cst_36 = arith.constant 0.000000e+00 : f32
      %112 = vector.broadcast %cst_36 : f32 to vector<1x512xf32>
      %113 = arith.maximumf %111, %112 : vector<1x512xf32>
      %114 = vector.broadcast %96 : f32 to vector<1x512xf32>
      %115 = arith.minimumf %3, %114 : vector<1x512xf32>
      %116 = vector.broadcast %92 : f32 to vector<1x512xf32>
      %117 = arith.maximumf %1, %116 : vector<1x512xf32>
      %118 = arith.subf %115, %117 : vector<1x512xf32>
      %cst_37 = arith.constant 1.000000e+00 : f32
      %119 = vector.broadcast %cst_37 : f32 to vector<1x512xf32>
      %120 = arith.addf %118, %119 : vector<1x512xf32>
      %cst_38 = arith.constant 0.000000e+00 : f32
      %121 = vector.broadcast %cst_38 : f32 to vector<1x512xf32>
      %122 = arith.maximumf %120, %121 : vector<1x512xf32>
      %123 = arith.mulf %113, %122 : vector<1x512xf32>
      %124 = vector.broadcast %101 : f32 to vector<1x512xf32>
      %125 = arith.addf %10, %124 : vector<1x512xf32>
      %126 = arith.subf %125, %123 : vector<1x512xf32>
      %127 = arith.divf %123, %126 : vector<1x512xf32>
      %cst_39 = arith.constant 0.000000e+00 : f32
      %128 = vector.broadcast %cst_39 : f32 to vector<1x512xf32>
      %129 = arith.select %104, %128, %127 : vector<1x512xf32>
      %130 = arith.cmpf ogt, %129, %73 : vector<1x512xf32>
      %131 = arith.select %130, %129, %73 : vector<1x512xi1>, vector<1x512xf32>
      %cst_40 = arith.constant 1.000000e+00 : f32
      %132 = vector.broadcast %cst_40 : f32 to vector<1x512xf32>
      %133 = arith.select %130, %132, %75 : vector<1x512xi1>, vector<1x512xf32>
      %134 = vector.broadcast %90 : f32 to vector<1x512xf32>
      %135 = arith.select %130, %134, %77 : vector<1x512xi1>, vector<1x512xf32>
      %136 = vector.broadcast %92 : f32 to vector<1x512xf32>
      %137 = arith.select %130, %136, %79 : vector<1x512xi1>, vector<1x512xf32>
      %138 = vector.broadcast %94 : f32 to vector<1x512xf32>
      %139 = arith.select %130, %138, %81 : vector<1x512xi1>, vector<1x512xf32>
      %140 = vector.broadcast %96 : f32 to vector<1x512xf32>
      %141 = arith.select %130, %140, %83 : vector<1x512xi1>, vector<1x512xf32>
      %c1_41 = arith.constant 1 : index
      %c0_42 = arith.constant 0 : index
      %142 = vector.load %arg7[%c1_41, %c0_42] : memref<8x512xf32, #tpu.memory_space<vmem>>, vector<1x512xf32>
      %143 = arith.cmpf oeq, %129, %142 : vector<1x512xf32>
      %144 = arith.extui %143 : vector<1x512xi1> to vector<1x512xi32>
      %145 = arith.sitofp %144 : vector<1x512xi32> to vector<1x512xf32>
      %146 = arith.addf %88, %145 : vector<1x512xf32>
      %147 = arith.index_cast %arg0 : i32 to index
      %c8 = arith.constant 8 : index
      %148 = memref.load %arg4[%147, %c8] : memref<2x20xf32, #tpu.memory_space<smem>>
      %149 = arith.index_cast %arg0 : i32 to index
      %c9 = arith.constant 9 : index
      %150 = memref.load %arg4[%149, %c9] : memref<2x20xf32, #tpu.memory_space<smem>>
      %151 = arith.index_cast %arg0 : i32 to index
      %c10 = arith.constant 10 : index
      %152 = memref.load %arg4[%151, %c10] : memref<2x20xf32, #tpu.memory_space<smem>>
      %153 = arith.index_cast %arg0 : i32 to index
      %c11 = arith.constant 11 : index
      %154 = memref.load %arg4[%153, %c11] : memref<2x20xf32, #tpu.memory_space<smem>>
      %155 = arith.subf %152, %148 : f32
      %cst_43 = arith.constant 1.000000e+00 : f32
      %156 = arith.addf %155, %cst_43 : f32
      %157 = arith.subf %154, %150 : f32
      %cst_44 = arith.constant 1.000000e+00 : f32
      %158 = arith.addf %157, %cst_44 : f32
      %159 = arith.mulf %156, %158 : f32
      %cst_45 = arith.constant 1.000000e+00 : f32
      %160 = arith.cmpf oeq, %156, %cst_45 : f32
      %cst_46 = arith.constant 1.000000e+00 : f32
      %161 = arith.cmpf oeq, %158, %cst_46 : f32
      %162 = arith.andi %160, %161 : i1
      %163 = vector.broadcast %152 : f32 to vector<1x512xf32>
      %164 = arith.minimumf %2, %163 : vector<1x512xf32>
      %165 = vector.broadcast %148 : f32 to vector<1x512xf32>
      %166 = arith.maximumf %0, %165 : vector<1x512xf32>
      %167 = arith.subf %164, %166 : vector<1x512xf32>
      %cst_47 = arith.constant 1.000000e+00 : f32
      %168 = vector.broadcast %cst_47 : f32 to vector<1x512xf32>
      %169 = arith.addf %167, %168 : vector<1x512xf32>
      %cst_48 = arith.constant 0.000000e+00 : f32
      %170 = vector.broadcast %cst_48 : f32 to vector<1x512xf32>
      %171 = arith.maximumf %169, %170 : vector<1x512xf32>
      %172 = vector.broadcast %154 : f32 to vector<1x512xf32>
      %173 = arith.minimumf %3, %172 : vector<1x512xf32>
      %174 = vector.broadcast %150 : f32 to vector<1x512xf32>
      %175 = arith.maximumf %1, %174 : vector<1x512xf32>
      %176 = arith.subf %173, %175 : vector<1x512xf32>
      %cst_49 = arith.constant 1.000000e+00 : f32
      %177 = vector.broadcast %cst_49 : f32 to vector<1x512xf32>
      %178 = arith.addf %176, %177 : vector<1x512xf32>
      %cst_50 = arith.constant 0.000000e+00 : f32
      %179 = vector.broadcast %cst_50 : f32 to vector<1x512xf32>
      %180 = arith.maximumf %178, %179 : vector<1x512xf32>
      %181 = arith.mulf %171, %180 : vector<1x512xf32>
      %182 = vector.broadcast %159 : f32 to vector<1x512xf32>
      %183 = arith.addf %10, %182 : vector<1x512xf32>
      %184 = arith.subf %183, %181 : vector<1x512xf32>
      %185 = arith.divf %181, %184 : vector<1x512xf32>
      %cst_51 = arith.constant 0.000000e+00 : f32
      %186 = vector.broadcast %cst_51 : f32 to vector<1x512xf32>
      %187 = arith.select %162, %186, %185 : vector<1x512xf32>
      %188 = arith.cmpf ogt, %187, %131 : vector<1x512xf32>
      %189 = arith.select %188, %187, %131 : vector<1x512xi1>, vector<1x512xf32>
      %cst_52 = arith.constant 2.000000e+00 : f32
      %190 = vector.broadcast %cst_52 : f32 to vector<1x512xf32>
      %191 = arith.select %188, %190, %133 : vector<1x512xi1>, vector<1x512xf32>
      %192 = vector.broadcast %148 : f32 to vector<1x512xf32>
      %193 = arith.select %188, %192, %135 : vector<1x512xi1>, vector<1x512xf32>
      %194 = vector.broadcast %150 : f32 to vector<1x512xf32>
      %195 = arith.select %188, %194, %137 : vector<1x512xi1>, vector<1x512xf32>
      %196 = vector.broadcast %152 : f32 to vector<1x512xf32>
      %197 = arith.select %188, %196, %139 : vector<1x512xi1>, vector<1x512xf32>
      %198 = vector.broadcast %154 : f32 to vector<1x512xf32>
      %199 = arith.select %188, %198, %141 : vector<1x512xi1>, vector<1x512xf32>
      %c2_53 = arith.constant 2 : index
      %c0_54 = arith.constant 0 : index
      %200 = vector.load %arg7[%c2_53, %c0_54] : memref<8x512xf32, #tpu.memory_space<vmem>>, vector<1x512xf32>
      %201 = arith.cmpf oeq, %187, %200 : vector<1x512xf32>
      %202 = arith.extui %201 : vector<1x512xi1> to vector<1x512xi32>
      %203 = arith.sitofp %202 : vector<1x512xi32> to vector<1x512xf32>
      %204 = arith.addf %146, %203 : vector<1x512xf32>
      %205 = arith.index_cast %arg0 : i32 to index
      %c12 = arith.constant 12 : index
      %206 = memref.load %arg4[%205, %c12] : memref<2x20xf32, #tpu.memory_space<smem>>
      %207 = arith.index_cast %arg0 : i32 to index
      %c13 = arith.constant 13 : index
      %208 = memref.load %arg4[%207, %c13] : memref<2x20xf32, #tpu.memory_space<smem>>
      %209 = arith.index_cast %arg0 : i32 to index
      %c14 = arith.constant 14 : index
      %210 = memref.load %arg4[%209, %c14] : memref<2x20xf32, #tpu.memory_space<smem>>
      %211 = arith.index_cast %arg0 : i32 to index
      %c15 = arith.constant 15 : index
      %212 = memref.load %arg4[%211, %c15] : memref<2x20xf32, #tpu.memory_space<smem>>
      %213 = arith.subf %210, %206 : f32
      %cst_55 = arith.constant 1.000000e+00 : f32
      %214 = arith.addf %213, %cst_55 : f32
      %215 = arith.subf %212, %208 : f32
      %cst_56 = arith.constant 1.000000e+00 : f32
      %216 = arith.addf %215, %cst_56 : f32
      %217 = arith.mulf %214, %216 : f32
      %cst_57 = arith.constant 1.000000e+00 : f32
      %218 = arith.cmpf oeq, %214, %cst_57 : f32
      %cst_58 = arith.constant 1.000000e+00 : f32
      %219 = arith.cmpf oeq, %216, %cst_58 : f32
      %220 = arith.andi %218, %219 : i1
      %221 = vector.broadcast %210 : f32 to vector<1x512xf32>
      %222 = arith.minimumf %2, %221 : vector<1x512xf32>
      %223 = vector.broadcast %206 : f32 to vector<1x512xf32>
      %224 = arith.maximumf %0, %223 : vector<1x512xf32>
      %225 = arith.subf %222, %224 : vector<1x512xf32>
      %cst_59 = arith.constant 1.000000e+00 : f32
      %226 = vector.broadcast %cst_59 : f32 to vector<1x512xf32>
      %227 = arith.addf %225, %226 : vector<1x512xf32>
      %cst_60 = arith.constant 0.000000e+00 : f32
      %228 = vector.broadcast %cst_60 : f32 to vector<1x512xf32>
      %229 = arith.maximumf %227, %228 : vector<1x512xf32>
      %230 = vector.broadcast %212 : f32 to vector<1x512xf32>
      %231 = arith.minimumf %3, %230 : vector<1x512xf32>
      %232 = vector.broadcast %208 : f32 to vector<1x512xf32>
      %233 = arith.maximumf %1, %232 : vector<1x512xf32>
      %234 = arith.subf %231, %233 : vector<1x512xf32>
      %cst_61 = arith.constant 1.000000e+00 : f32
      %235 = vector.broadcast %cst_61 : f32 to vector<1x512xf32>
      %236 = arith.addf %234, %235 : vector<1x512xf32>
      %cst_62 = arith.constant 0.000000e+00 : f32
      %237 = vector.broadcast %cst_62 : f32 to vector<1x512xf32>
      %238 = arith.maximumf %236, %237 : vector<1x512xf32>
      %239 = arith.mulf %229, %238 : vector<1x512xf32>
      %240 = vector.broadcast %217 : f32 to vector<1x512xf32>
      %241 = arith.addf %10, %240 : vector<1x512xf32>
      %242 = arith.subf %241, %239 : vector<1x512xf32>
      %243 = arith.divf %239, %242 : vector<1x512xf32>
      %cst_63 = arith.constant 0.000000e+00 : f32
      %244 = vector.broadcast %cst_63 : f32 to vector<1x512xf32>
      %245 = arith.select %220, %244, %243 : vector<1x512xf32>
      %246 = arith.cmpf ogt, %245, %189 : vector<1x512xf32>
      %247 = arith.select %246, %245, %189 : vector<1x512xi1>, vector<1x512xf32>
      %cst_64 = arith.constant 3.000000e+00 : f32
      %248 = vector.broadcast %cst_64 : f32 to vector<1x512xf32>
      %249 = arith.select %246, %248, %191 : vector<1x512xi1>, vector<1x512xf32>
      %250 = vector.broadcast %206 : f32 to vector<1x512xf32>
      %251 = arith.select %246, %250, %193 : vector<1x512xi1>, vector<1x512xf32>
      %252 = vector.broadcast %208 : f32 to vector<1x512xf32>
      %253 = arith.select %246, %252, %195 : vector<1x512xi1>, vector<1x512xf32>
      %254 = vector.broadcast %210 : f32 to vector<1x512xf32>
      %255 = arith.select %246, %254, %197 : vector<1x512xi1>, vector<1x512xf32>
      %256 = vector.broadcast %212 : f32 to vector<1x512xf32>
      %257 = arith.select %246, %256, %199 : vector<1x512xi1>, vector<1x512xf32>
      %c3_65 = arith.constant 3 : index
      %c0_66 = arith.constant 0 : index
      %258 = vector.load %arg7[%c3_65, %c0_66] : memref<8x512xf32, #tpu.memory_space<vmem>>, vector<1x512xf32>
      %259 = arith.cmpf oeq, %245, %258 : vector<1x512xf32>
      %260 = arith.extui %259 : vector<1x512xi1> to vector<1x512xi32>
      %261 = arith.sitofp %260 : vector<1x512xi32> to vector<1x512xf32>
      %262 = arith.addf %204, %261 : vector<1x512xf32>
      %263 = arith.index_cast %arg0 : i32 to index
      %c16 = arith.constant 16 : index
      %264 = memref.load %arg4[%263, %c16] : memref<2x20xf32, #tpu.memory_space<smem>>
      %265 = arith.index_cast %arg0 : i32 to index
      %c17 = arith.constant 17 : index
      %266 = memref.load %arg4[%265, %c17] : memref<2x20xf32, #tpu.memory_space<smem>>
      %267 = arith.index_cast %arg0 : i32 to index
      %c18 = arith.constant 18 : index
      %268 = memref.load %arg4[%267, %c18] : memref<2x20xf32, #tpu.memory_space<smem>>
      %269 = arith.index_cast %arg0 : i32 to index
      %c19 = arith.constant 19 : index
      %270 = memref.load %arg4[%269, %c19] : memref<2x20xf32, #tpu.memory_space<smem>>
      %271 = arith.subf %268, %264 : f32
      %cst_67 = arith.constant 1.000000e+00 : f32
      %272 = arith.addf %271, %cst_67 : f32
      %273 = arith.subf %270, %266 : f32
      %cst_68 = arith.constant 1.000000e+00 : f32
      %274 = arith.addf %273, %cst_68 : f32
      %275 = arith.mulf %272, %274 : f32
      %cst_69 = arith.constant 1.000000e+00 : f32
      %276 = arith.cmpf oeq, %272, %cst_69 : f32
      %cst_70 = arith.constant 1.000000e+00 : f32
      %277 = arith.cmpf oeq, %274, %cst_70 : f32
      %278 = arith.andi %276, %277 : i1
      %279 = vector.broadcast %268 : f32 to vector<1x512xf32>
      %280 = arith.minimumf %2, %279 : vector<1x512xf32>
      %281 = vector.broadcast %264 : f32 to vector<1x512xf32>
      %282 = arith.maximumf %0, %281 : vector<1x512xf32>
      %283 = arith.subf %280, %282 : vector<1x512xf32>
      %cst_71 = arith.constant 1.000000e+00 : f32
      %284 = vector.broadcast %cst_71 : f32 to vector<1x512xf32>
      %285 = arith.addf %283, %284 : vector<1x512xf32>
      %cst_72 = arith.constant 0.000000e+00 : f32
      %286 = vector.broadcast %cst_72 : f32 to vector<1x512xf32>
      %287 = arith.maximumf %285, %286 : vector<1x512xf32>
      %288 = vector.broadcast %270 : f32 to vector<1x512xf32>
      %289 = arith.minimumf %3, %288 : vector<1x512xf32>
      %290 = vector.broadcast %266 : f32 to vector<1x512xf32>
      %291 = arith.maximumf %1, %290 : vector<1x512xf32>
      %292 = arith.subf %289, %291 : vector<1x512xf32>
      %cst_73 = arith.constant 1.000000e+00 : f32
      %293 = vector.broadcast %cst_73 : f32 to vector<1x512xf32>
      %294 = arith.addf %292, %293 : vector<1x512xf32>
      %cst_74 = arith.constant 0.000000e+00 : f32
      %295 = vector.broadcast %cst_74 : f32 to vector<1x512xf32>
      %296 = arith.maximumf %294, %295 : vector<1x512xf32>
      %297 = arith.mulf %287, %296 : vector<1x512xf32>
      %298 = vector.broadcast %275 : f32 to vector<1x512xf32>
      %299 = arith.addf %10, %298 : vector<1x512xf32>
      %300 = arith.subf %299, %297 : vector<1x512xf32>
      %301 = arith.divf %297, %300 : vector<1x512xf32>
      %cst_75 = arith.constant 0.000000e+00 : f32
      %302 = vector.broadcast %cst_75 : f32 to vector<1x512xf32>
      %303 = arith.select %278, %302, %301 : vector<1x512xf32>
      %304 = arith.cmpf ogt, %303, %247 : vector<1x512xf32>
      %305 = arith.select %304, %303, %247 : vector<1x512xi1>, vector<1x512xf32>
      %cst_76 = arith.constant 4.000000e+00 : f32
      %306 = vector.broadcast %cst_76 : f32 to vector<1x512xf32>
      %307 = arith.select %304, %306, %249 : vector<1x512xi1>, vector<1x512xf32>
      %308 = vector.broadcast %264 : f32 to vector<1x512xf32>
      %309 = arith.select %304, %308, %251 : vector<1x512xi1>, vector<1x512xf32>
      %310 = vector.broadcast %266 : f32 to vector<1x512xf32>
      %311 = arith.select %304, %310, %253 : vector<1x512xi1>, vector<1x512xf32>
      %312 = vector.broadcast %268 : f32 to vector<1x512xf32>
      %313 = arith.select %304, %312, %255 : vector<1x512xi1>, vector<1x512xf32>
      %314 = vector.broadcast %270 : f32 to vector<1x512xf32>
      %315 = arith.select %304, %314, %257 : vector<1x512xi1>, vector<1x512xf32>
      %c4_77 = arith.constant 4 : index
      %c0_78 = arith.constant 0 : index
      %316 = vector.load %arg7[%c4_77, %c0_78] : memref<8x512xf32, #tpu.memory_space<vmem>>, vector<1x512xf32>
      %317 = arith.cmpf oeq, %303, %316 : vector<1x512xf32>
      %318 = arith.extui %317 : vector<1x512xi1> to vector<1x512xi32>
      %319 = arith.sitofp %318 : vector<1x512xi32> to vector<1x512xf32>
      %320 = arith.addf %262, %319 : vector<1x512xf32>
      %cst_79 = arith.constant 1.000000e+00 : f32
      %321 = vector.broadcast %cst_79 : f32 to vector<1x512xf32>
      %322 = arith.divf %321, %6 : vector<1x512xf32>
      %cst_80 = arith.constant 1.000000e+00 : f32
      %323 = vector.broadcast %cst_80 : f32 to vector<1x512xf32>
      %324 = arith.divf %323, %9 : vector<1x512xf32>
      %cst_81 = arith.constant 5.000000e-01 : f32
      %325 = vector.broadcast %cst_81 : f32 to vector<1x512xf32>
      %326 = arith.mulf %325, %6 : vector<1x512xf32>
      %327 = arith.addf %0, %326 : vector<1x512xf32>
      %cst_82 = arith.constant 5.000000e-01 : f32
      %328 = vector.broadcast %cst_82 : f32 to vector<1x512xf32>
      %329 = arith.mulf %328, %9 : vector<1x512xf32>
      %330 = arith.addf %1, %329 : vector<1x512xf32>
      %331 = arith.subf %313, %309 : vector<1x512xf32>
      %cst_83 = arith.constant 1.000000e+00 : f32
      %332 = vector.broadcast %cst_83 : f32 to vector<1x512xf32>
      %333 = arith.addf %331, %332 : vector<1x512xf32>
      %334 = arith.subf %315, %311 : vector<1x512xf32>
      %cst_84 = arith.constant 1.000000e+00 : f32
      %335 = vector.broadcast %cst_84 : f32 to vector<1x512xf32>
      %336 = arith.addf %334, %335 : vector<1x512xf32>
      %cst_85 = arith.constant 5.000000e-01 : f32
      %337 = vector.broadcast %cst_85 : f32 to vector<1x512xf32>
      %338 = arith.mulf %337, %333 : vector<1x512xf32>
      %339 = arith.addf %309, %338 : vector<1x512xf32>
      %cst_86 = arith.constant 5.000000e-01 : f32
      %340 = vector.broadcast %cst_86 : f32 to vector<1x512xf32>
      %341 = arith.mulf %340, %336 : vector<1x512xf32>
      %342 = arith.addf %311, %341 : vector<1x512xf32>
      %343 = arith.subf %339, %327 : vector<1x512xf32>
      %344 = arith.mulf %343, %322 : vector<1x512xf32>
      %345 = arith.subf %342, %330 : vector<1x512xf32>
      %346 = arith.mulf %345, %324 : vector<1x512xf32>
      %347 = arith.mulf %333, %322 : vector<1x512xf32>
      %348 = math.log %347 : vector<1x512xf32>
      %349 = arith.mulf %336, %324 : vector<1x512xf32>
      %350 = math.log %349 : vector<1x512xf32>
      %cst_87 = arith.constant 0.000000e+00 : f32
      %351 = vector.broadcast %cst_87 : f32 to vector<1x512xf32>
      %352 = arith.cmpf ogt, %320, %351 : vector<1x512xf32>
      %cst_88 = arith.constant 0.699999988 : f32
      %353 = vector.broadcast %cst_88 : f32 to vector<1x512xf32>
      %354 = arith.cmpf oge, %305, %353 : vector<1x512xf32>
      %355 = arith.ori %352, %354 : vector<1x512xi1>
      %cst_89 = arith.constant 3.000000e-01 : f32
      %356 = vector.broadcast %cst_89 : f32 to vector<1x512xf32>
      %357 = arith.cmpf olt, %305, %356 : vector<1x512xf32>
      %cst_90 = arith.constant 0.000000e+00 : f32
      %cst_91 = arith.constant -1.000000e+00 : f32
      %358 = vector.broadcast %cst_90 : f32 to vector<1x512xf32>
      %359 = vector.broadcast %cst_91 : f32 to vector<1x512xf32>
      %360 = arith.select %357, %358, %359 : vector<1x512xi1>, vector<1x512xf32>
      %cst_92 = arith.constant 1.000000e+00 : f32
      %361 = vector.broadcast %cst_92 : f32 to vector<1x512xf32>
      %362 = arith.select %355, %361, %360 : vector<1x512xi1>, vector<1x512xf32>
      %c0_93 = arith.constant 0 : index
      %c0_94 = arith.constant 0 : index
      %c0_95 = arith.constant 0 : index
      %c0_96 = arith.constant 0 : index
      %363 = vector.load %arg6[%c0_93, %c0_94, %c0_95, %c0_96] : memref<1x1x8x512xf32, #tpu.memory_space<vmem>>, vector<1x1x1x512xf32>
      %364 = vector.shape_cast %363 : vector<1x1x1x512xf32> to vector<1x512xf32>
      %365 = vector.shape_cast %305 : vector<1x512xf32> to vector<1x1x1x512xf32>
      tpu.vector_store %arg6[%c0_93, %c0_94, %c0_95, %c0_96], %365 {strides = array<i32>} : memref<1x1x8x512xf32, #tpu.memory_space<vmem>>, vector<1x1x1x512xf32>,
      %c0_97 = arith.constant 0 : index
      %c0_98 = arith.constant 0 : index
      %c1_99 = arith.constant 1 : index
      %c0_100 = arith.constant 0 : index
      %366 = vector.load %arg6[%c0_97, %c0_98, %c1_99, %c0_100] : memref<1x1x8x512xf32, #tpu.memory_space<vmem>>, vector<1x1x1x512xf32>
      %367 = vector.shape_cast %366 : vector<1x1x1x512xf32> to vector<1x512xf32>
      %368 = vector.shape_cast %307 : vector<1x512xf32> to vector<1x1x1x512xf32>
      tpu.vector_store %arg6[%c0_97, %c0_98, %c1_99, %c0_100], %368 {strides = array<i32>} : memref<1x1x8x512xf32, #tpu.memory_space<vmem>>, vector<1x1x1x512xf32>,
      %c0_101 = arith.constant 0 : index
      %c0_102 = arith.constant 0 : index
      %c2_103 = arith.constant 2 : index
      %c0_104 = arith.constant 0 : index
      %369 = vector.load %arg6[%c0_101, %c0_102, %c2_103, %c0_104] : memref<1x1x8x512xf32, #tpu.memory_space<vmem>>, vector<1x1x1x512xf32>
      %370 = vector.shape_cast %369 : vector<1x1x1x512xf32> to vector<1x512xf32>
      %371 = vector.shape_cast %320 : vector<1x512xf32> to vector<1x1x1x512xf32>
      tpu.vector_store %arg6[%c0_101, %c0_102, %c2_103, %c0_104], %371 {strides = array<i32>} : memref<1x1x8x512xf32, #tpu.memory_space<vmem>>, vector<1x1x1x512xf32>,
      %c0_105 = arith.constant 0 : index
      %c0_106 = arith.constant 0 : index
      %c3_107 = arith.constant 3 : index
      %c0_108 = arith.constant 0 : index
      %372 = vector.load %arg6[%c0_105, %c0_106, %c3_107, %c0_108] : memref<1x1x8x512xf32, #tpu.memory_space<vmem>>, vector<1x1x1x512xf32>
      %373 = vector.shape_cast %372 : vector<1x1x1x512xf32> to vector<1x512xf32>
      %374 = vector.shape_cast %344 : vector<1x512xf32> to vector<1x1x1x512xf32>
      tpu.vector_store %arg6[%c0_105, %c0_106, %c3_107, %c0_108], %374 {strides = array<i32>} : memref<1x1x8x512xf32, #tpu.memory_space<vmem>>, vector<1x1x1x512xf32>,
      %c0_109 = arith.constant 0 : index
      %c0_110 = arith.constant 0 : index
      %c4_111 = arith.constant 4 : index
      %c0_112 = arith.constant 0 : index
      %375 = vector.load %arg6[%c0_109, %c0_110, %c4_111, %c0_112] : memref<1x1x8x512xf32, #tpu.memory_space<vmem>>, vector<1x1x1x512xf32>
      %376 = vector.shape_cast %375 : vector<1x1x1x512xf32> to vector<1x512xf32>
      %377 = vector.shape_cast %346 : vector<1x512xf32> to vector<1x1x1x512xf32>
      tpu.vector_store %arg6[%c0_109, %c0_110, %c4_111, %c0_112], %377 {strides = array<i32>} : memref<1x1x8x512xf32, #tpu.memory_space<vmem>>, vector<1x1x1x512xf32>,
      %c0_113 = arith.constant 0 : index
      %c0_114 = arith.constant 0 : index
      %c5_115 = arith.constant 5 : index
      %c0_116 = arith.constant 0 : index
      %378 = vector.load %arg6[%c0_113, %c0_114, %c5_115, %c0_116] : memref<1x1x8x512xf32, #tpu.memory_space<vmem>>, vector<1x1x1x512xf32>
      %379 = vector.shape_cast %378 : vector<1x1x1x512xf32> to vector<1x512xf32>
      %380 = vector.shape_cast %348 : vector<1x512xf32> to vector<1x1x1x512xf32>
      tpu.vector_store %arg6[%c0_113, %c0_114, %c5_115, %c0_116], %380 {strides = array<i32>} : memref<1x1x8x512xf32, #tpu.memory_space<vmem>>, vector<1x1x1x512xf32>,
      %c0_117 = arith.constant 0 : index
      %c0_118 = arith.constant 0 : index
      %c6_119 = arith.constant 6 : index
      %c0_120 = arith.constant 0 : index
      %381 = vector.load %arg6[%c0_117, %c0_118, %c6_119, %c0_120] : memref<1x1x8x512xf32, #tpu.memory_space<vmem>>, vector<1x1x1x512xf32>
      %382 = vector.shape_cast %381 : vector<1x1x1x512xf32> to vector<1x512xf32>
      %383 = vector.shape_cast %350 : vector<1x512xf32> to vector<1x1x1x512xf32>
      tpu.vector_store %arg6[%c0_117, %c0_118, %c6_119, %c0_120], %383 {strides = array<i32>} : memref<1x1x8x512xf32, #tpu.memory_space<vmem>>, vector<1x1x1x512xf32>,
      %c0_121 = arith.constant 0 : index
      %c0_122 = arith.constant 0 : index
      %c7_123 = arith.constant 7 : index
      %c0_124 = arith.constant 0 : index
      %384 = vector.load %arg6[%c0_121, %c0_122, %c7_123, %c0_124] : memref<1x1x8x512xf32, #tpu.memory_space<vmem>>, vector<1x1x1x512xf32>
      %385 = vector.shape_cast %384 : vector<1x1x1x512xf32> to vector<1x512xf32>
      %386 = vector.shape_cast %362 : vector<1x512xf32> to vector<1x1x1x512xf32>
      tpu.vector_store %arg6[%c0_121, %c0_122, %c7_123, %c0_124], %386 {strides = array<i32>} : memref<1x1x8x512xf32, #tpu.memory_space<vmem>>, vector<1x1x1x512xf32>,
    } else {
    }
    return
  }
  func.func @transform_0(%arg0: i32, %arg1: i32, %arg2: i32) -> i32 {
    %c0_i32 = arith.constant 0 : i32
    %c0_i32_0 = arith.constant 0 : i32
    return %c0_i32 : i32
  }
  func.func @transform_1(%arg0: i32, %arg1: i32, %arg2: i32) -> (i32, i32) {
    %c0_i32 = arith.constant 0 : i32
    %c0_i32_0 = arith.constant 0 : i32
    %c0_i32_1 = arith.constant 0 : i32
    return %c0_i32, %c0_i32_0 : i32, i32
  }
  func.func @transform_2(%arg0: i32, %arg1: i32, %arg2: i32) -> (i32, i32) {
    %c0_i32 = arith.constant 0 : i32
    %c0_i32_0 = arith.constant 0 : i32
    return %c0_i32, %arg2 : i32, i32
  }
  func.func @transform_3(%arg0: i32, %arg1: i32, %arg2: i32) -> (i32, i32, i32, i32) {
    %c0_i32 = arith.constant 0 : i32
    %c0_i32_0 = arith.constant 0 : i32
    return %arg0, %arg1, %c0_i32, %arg2 : i32, i32, i32, i32
  }
}

</mosaic_0001>

<llo_original>
// kernel: tpu_custom_call.1
$region0: #{tpu_custom_call.1}
  #allocation0 [shape = 'u32[]', space=smem, size = 0x4, offset = 0x4, fixed_abs, tag = 'smem constant byte address 0x4 - core index']
  #allocation1 [shape = 'u32[144,128]{1,0:T(1,128)}', space=vmem, size = 0x12000, scoped, tag = 'internal scratch']
  #allocation2 [shape = 'f32[8,512]{1,0:T(8,128)}', space=vmem, size = 0x4000, scoped, tag = 'scratch operand']
  #allocation3 [shape = 's32[1]{0:T(128)S(6)}', space=smem, size = 0x200, scoped, tag = 'scoped memory for tpu_custom_call.1']
  %s0 = inlined_call_operand.<no memory space> [shape: s32[1], index: 0, kind: input, shape index: {}]
  %s1 = inlined_call_operand.vmem [shape: f32[2,20], index: 1, kind: input, shape index: {}]
  %s2 = inlined_call_operand.hbm [shape: f32[8,512], index: 2, kind: input, shape index: {}]
  %s3 = inlined_call_operand.hbm [shape: f32[2,2,8,512], index: 3, kind: output, shape index: {}]
  %s4 = sld [smem:[#allocation0]]
  $region69: #{tpu_custom_call.1} parent=0
    _
  %s6 = ssub.s32 1, %s4
  %s7 = scalar_select 0, %s6, %s4
  %8 = sst [smem:[#allocation3]] %s0
  $region1: #{tpu_custom_call.1} parent=0
    #allocation4 [shape = 'u8[1024]{0}', space=smem, size = 0x400, scoped, tag = 'input window, operand 1, single buffered']
    #allocation5 [shape = 's32[2]{0}', space=sflag, size = 0x8, scoped, tag = 'scoped memory for tpu_custom_call.1']
    #allocation6 [shape = 's32[2]{0}', space=sflag, size = 0x8, scoped, tag = 'scoped memory for tpu_custom_call.1']
    #allocation7 [shape = 's32[2]{0}', space=sflag, size = 0x8, scoped, tag = 'scoped memory for tpu_custom_call.1']
    #allocation8 [shape = 'u8[16384]{0}', space=vmem, size = 0x4000, scoped, tag = 'input window, operand 2, single buffered']
    #allocation9 [shape = 'u8[32768]{0}', space=vmem, size = 0x8000, scoped, tag = 'output window, operand 0']
    %9 = vsyncpa [#allocation7], 0
    %10 = vsyncpa [#allocation5], 0
    %11 = vsyncpa [#allocation6], 0
    %s12 = scalar_lea.sflag [#allocation6], 1
    %13 = vsyncpa %s12, 0
    loop: start=0, step=1, limit=6
    $region2: #{tpu_custom_call.1} parent=1 // loop_pre_header
      _
    $region3: #{tpu_custom_call.1} parent=1 // loop_header
      %s15 = sphi 0, %s19
      %p16 = scmp.ge.s32.totalorder %s15, 6
      %s22 = sphi 0, %s41
      %s23 = sphi 0, %s37
      %s24 = sphi 0, %s33
      %s25 = sphi 0, %s22
      %s26 = sphi 0, %s23
      %s27 = sphi 0, %s24
      %s28 = sphi 0, %s25
      %s29 = sphi 0, %s26
      %s30 = sphi 0, %s27
      %s42 = sphi 0, %s42
      %s44 = sphi 0, %s42
      %s45 = sphi 0, %s44
      %s59 = sphi 0, %s45
      %s63 = sphi 0, %s63
      %s65 = sphi 0, %s63
      %s66 = sphi 0, %s65
      %s80 = sphi 0, %s66
      %s86 = sphi 0, %s88
      %s89 = sphi 0, %s86
      %s90 = sphi 0, %s89
      %s106 = sphi 0, %s90
      %s116 = sphi 0, %s118
      %s119 = sphi 0, %s116
      %s120 = sphi 0, %s119
      %s136 = sphi 0, %s120
    $region4: #{tpu_custom_call.1} parent=1 // loop_header_branch
      %18 = sbr.rel (%p16) target = $region8
    $region5: #{tpu_custom_call.1} parent=1 // loop_body
      %s20 = ssub.s32 %s15, 1
      %s21 = ssub.s32 %s15, 2
      %s31 = sadd.s32 1, %s24
      %p32 = scmp.ge.s32.totalorder %s31, 1
      %s33 = scalar_select %p32, 0, %s31
      %s34 = sadd.s32 1, %s23
      %s35 = scalar_select %p32, %s34, %s23
      %p36 = scmp.ge.s32.totalorder %s35, 2
      %s37 = scalar_select %p36, 0, %s35
      %s38 = sadd.s32 1, %s22
      %s39 = scalar_select %p36, %s38, %s22
      %p40 = scmp.ge.s32.totalorder %s39, 2
      %s41 = scalar_select %p40, 0, %s39
      %s43 = sadd.s32 %s42, 1
      %p46 = scmp.eq.s32.totalorder %s15, 3
      %p47 = scmp.ne.s32.totalorder %s42, %s44
      %p48 = scmp.eq.s32.totalorder %s15, 0
      %p49 = por %p47, %p48
      %p50 = scmp.ne.s32.totalorder %s42, %s44
      %p51 = scmp.eq.s32.totalorder %s20, 3
      %p52 = por %p50, %p51
      %p53 = scmp.ne.s32.totalorder %s44, %s45
      %p54 = scmp.eq.s32.totalorder %s20, 0
      %p55 = por %p53, %p54
      %p56 = scmp.ne.s32.totalorder %s44, %s45
      %p57 = scmp.eq.s32.totalorder %s21, 3
      %p58 = por %p56, %p57
      %p60 = scmp.ne.s32.totalorder %s45, %s59
      %p61 = scmp.eq.s32.totalorder %s21, 0
      %p62 = por %p60, %p61
      %s64 = sadd.s32 %s63, 1
      %p67 = scmp.eq.s32.totalorder %s15, 3
      %p68 = scmp.ne.s32.totalorder %s63, %s65
      %p69 = scmp.eq.s32.totalorder %s15, 0
      %p70 = por %p68, %p69
      %p71 = scmp.ne.s32.totalorder %s63, %s65
      %p72 = scmp.eq.s32.totalorder %s20, 3
      %p73 = por %p71, %p72
      %p74 = scmp.ne.s32.totalorder %s65, %s66
      %p75 = scmp.eq.s32.totalorder %s20, 0
      %p76 = por %p74, %p75
      %p77 = scmp.ne.s32.totalorder %s65, %s66
      %p78 = scmp.eq.s32.totalorder %s21, 3
      %p79 = por %p77, %p78
      %p81 = scmp.ne.s32.totalorder %s66, %s80
      %p82 = scmp.eq.s32.totalorder %s21, 0
      %p83 = por %p81, %p82
      %s84 = ssub.s32 %s24, %s33
      %p85 = scmp.eq.s32.totalorder %s84, 0
      %s87 = sadd.s32 %s86, 1
      %s88 = scalar_select %p85, %s86, %s87
      %p91 = pneg %p85
      %p92 = scmp.eq.s32.totalorder %s15, 3
      %p93 = por %p91, %p92
      %p94 = scmp.ne.s32.totalorder %s86, %s89
      %p95 = scmp.eq.s32.totalorder %s15, 0
      %p96 = por %p94, %p95
      %p97 = scmp.ne.s32.totalorder %s86, %s89
      %p98 = scmp.eq.s32.totalorder %s20, 3
      %p99 = por %p97, %p98
      %p100 = scmp.ne.s32.totalorder %s89, %s90
      %p101 = scmp.eq.s32.totalorder %s20, 0
      %p102 = por %p100, %p101
      %p103 = scmp.ne.s32.totalorder %s89, %s90
      %p104 = scmp.eq.s32.totalorder %s21, 3
      %p105 = por %p103, %p104
      %p107 = scmp.ne.s32.totalorder %s90, %s106
      %p108 = scmp.eq.s32.totalorder %s21, 0
      %p109 = por %p107, %p108
      %s110 = ssub.s32 %s22, %s41
      %s111 = ssub.s32 %s23, %s37
      %s112 = sor.u32 %s110, %s111
      %s113 = ssub.s32 %s24, %s33
      %s114 = sor.u32 %s112, %s113
      %p115 = scmp.eq.s32.totalorder %s114, 0
      %s117 = sadd.s32 %s116, 1
      %s118 = scalar_select %p115, %s116, %s117
      %p121 = pneg %p115
      %p122 = scmp.eq.s32.totalorder %s15, 3
      %p123 = por %p121, %p122
      %p124 = scmp.ne.s32.totalorder %s116, %s119
      %p125 = scmp.eq.s32.totalorder %s15, 0
      %p126 = por %p124, %p125
      %p127 = scmp.ne.s32.totalorder %s116, %s119
      %p128 = scmp.eq.s32.totalorder %s20, 3
      %p129 = por %p127, %p128
      %p130 = scmp.ne.s32.totalorder %s119, %s120
      %p131 = scmp.eq.s32.totalorder %s20, 0
      %p132 = por %p130, %p131
      %p133 = scmp.ne.s32.totalorder %s119, %s120
      %p134 = scmp.eq.s32.totalorder %s21, 3
      %p135 = por %p133, %p134
      %p137 = scmp.ne.s32.totalorder %s120, %s136
      %p138 = scmp.eq.s32.totalorder %s21, 0
      %p139 = por %p137, %p138
      %p140 = scmp.le.s32.totalorder 1, %s15
      %p141 = scmp.lt.s32.totalorder %s15, 5
      %p142 = pnand %p140, %p141
      %p143 = pneg %p142
      // Predicated region
      $region9: #{tpu_custom_call.1} parent=5 // pred_check
        _
      $region10: #{tpu_custom_call.1} parent=5 // pred_check_branch
        %145 = sbr.rel (%p142) target = $region12
      $region11: #{tpu_custom_call.1} parent=5 // pred_region
        %s146 = ssub.s32 %s15, 1
        // Predicated region
        $region13: #{tpu_custom_call.1} parent=11 // pred_check
          %p147 = pneg %p55
        $region14: #{tpu_custom_call.1} parent=11 // pred_check_branch
          %149 = sbr.rel (%p147) target = $region16
        $region15: #{tpu_custom_call.1} parent=11 // pred_region
          _
        $region16: #{tpu_custom_call.1} parent=11 // pred_fallthru
          _
        // Predicated region
        $region17: #{tpu_custom_call.1} parent=11 // pred_check
          %p150 = pneg %p76
        $region18: #{tpu_custom_call.1} parent=11 // pred_check_branch
          %152 = sbr.rel (%p150) target = $region20
        $region19: #{tpu_custom_call.1} parent=11 // pred_region
          %s154 = ssub.s32 32, 32
          %155 = vsyncadd [#allocation7], %s154
          %s157 = sshll.u32 %s1, 4
          %s158 = int_to_ptr.vmem [resolvable:$true] %s157
          %160 = dma.vmem_to_smem %s158, 32, [#allocation4], [#allocation7]
        $region20: #{tpu_custom_call.1} parent=11 // pred_fallthru
          _
        // Predicated region
        $region21: #{tpu_custom_call.1} parent=11 // pred_check
          %p161 = pneg %p102
        $region22: #{tpu_custom_call.1} parent=11 // pred_check_branch
          %163 = sbr.rel (%p161) target = $region24
        $region23: #{tpu_custom_call.1} parent=11 // pred_region
          %s164 = smul.u32 4, %s27
          %s166 = ssub.s32 512, 512
          %167 = vsyncadd [#allocation5], %s166
          %s168 = smul.addr %s164, 128
          %s169 = scalar_lea.hbm %s2, %s168
          %s171 = sshll.u32 [#allocation8], 4
          %s172 = int_to_ptr.vmem [resolvable:$true] %s171
          %174 = dma.hbm_to_vmem [thread:$0]  %s169, 512, %s172, [#allocation5]
        $region24: #{tpu_custom_call.1} parent=11 // pred_fallthru
          _
      $region12: #{tpu_custom_call.1} parent=5 // pred_fallthru
        _
      %p175 = scmp.lt.s32.totalorder %s15, 4
      // Predicated region
      $region25: #{tpu_custom_call.1} parent=5 // pred_check
        %p176 = pneg %p175
      $region26: #{tpu_custom_call.1} parent=5 // pred_check_branch
        %178 = sbr.rel (%p176) target = $region28
      $region27: #{tpu_custom_call.1} parent=5 // pred_region
        _
      $region28: #{tpu_custom_call.1} parent=5 // pred_fallthru
        _
      %p179 = scmp.le.s32.totalorder 1, %s15
      %p180 = scmp.lt.s32.totalorder %s15, 5
      %p181 = pnand %p179, %p180
      %p182 = pneg %p181
      // Predicated region
      $region29: #{tpu_custom_call.1} parent=5 // pred_check
        _
      $region30: #{tpu_custom_call.1} parent=5 // pred_check_branch
        %184 = sbr.rel (%p181) target = $region32
      $region31: #{tpu_custom_call.1} parent=5 // pred_region
        %s185 = ssub.s32 %s15, 1
        // Predicated region
        $region33: #{tpu_custom_call.1} parent=31 // pred_check
          %p186 = pneg %p76
        $region34: #{tpu_custom_call.1} parent=31 // pred_check_branch
          %188 = sbr.rel (%p186) target = $region36
        $region35: #{tpu_custom_call.1} parent=31 // pred_region
          %189 = dma.done [#allocation7], 32
        $region36: #{tpu_custom_call.1} parent=31 // pred_fallthru
          _
        // Predicated region
        $region37: #{tpu_custom_call.1} parent=31 // pred_check
          %p190 = pneg %p102
        $region38: #{tpu_custom_call.1} parent=31 // pred_check_branch
          %192 = sbr.rel (%p190) target = $region40
        $region39: #{tpu_custom_call.1} parent=31 // pred_region
          %193 = dma.done [#allocation5], 512
        $region40: #{tpu_custom_call.1} parent=31 // pred_fallthru
          _
        %194 = sfence
        %p195 = pneg %p55
        %p196 = pneg %p52
        %p197 = pneg %p76
        %p198 = pneg %p73
        %p199 = pneg %p102
        %p200 = pneg %p99
        %p201 = pneg %p132
        %p202 = pneg %p129
        %s203 = sand.u32 %s119, 1
        %s204 = scalar_lea.sflag [#allocation6], %s203
        %s205 = sand.u32 %s119, 1
        %s206 = smul.addr %s205, 32
        %s207 = scalar_lea.vmem [#allocation9], %s206
        %s208 = smul.u32 4, %s27
        %s209 = smul.u32 4, %s27
        %v210 = vld [vmem:[#allocation8] ss:$8 sm:$0xf]
        %s211 = scalar_lea.vmem [#allocation8], 1
        %v212 = vld [vmem:[%s211] ss:$8 sm:$0xf]
        %s213 = scalar_lea.vmem [#allocation8], 2
        %v214 = vld [vmem:[%s213] ss:$8 sm:$0xf]
        %s215 = scalar_lea.vmem [#allocation8], 3
        %v216 = vld [vmem:[%s215] ss:$8 sm:$0xf]
        %v217 = vsub.f32 %v214, %v210
        %v218 = vadd.f32 %v217, 1.0
        %v219 = vsub.f32 %v216, %v212
        %v220 = vadd.f32 %v219, 1.0
        %v221 = vmul.f32 %v218, %v220
        %v222 = vlaneseq
        %v223 = vand.u32 %v222, 127
        %v224 = vadd.s32 %v223, 128
        %v225 = vadd.s32 %v223, 256
        %v226 = vadd.s32 %v223, 384
        %s227 = smul.u32 %s27, 512
        %v228 = vstv %s227
        %v229 = vadd.s32 %v228, %v223
        %v230 = vadd.s32 %v228, %v224
        %v231 = vadd.s32 %v228, %v225
        %v232 = vadd.s32 %v228, %v226
        %s233 = sld [smem:[#allocation3]]
        %v234 = vstv %s233
        %vm235 = vcmp.lt.s32.totalorder %v229, %v234
        %vm236 = vcmp.lt.s32.totalorder %v230, %v234
        %vm237 = vcmp.lt.s32.totalorder %v231, %v234
        %vm238 = vcmp.lt.s32.totalorder %v232, %v234
        %p239 = scmp.eq.s32.totalorder %s26, 0
        // Predicated region
        $region41: #{tpu_custom_call.1} parent=31 // pred_check
          %p240 = pneg %p239
        $region42: #{tpu_custom_call.1} parent=31 // pred_check_branch
          %242 = sbr.rel (%p240) target = $region44
        $region43: #{tpu_custom_call.1} parent=31 // pred_region
          %p243 = scmp.eq.s32.totalorder %s27, 0
          // Predicated region
          $region45: #{tpu_custom_call.1} parent=43 // pred_check
            %p244 = pneg %p243
          $region46: #{tpu_custom_call.1} parent=43 // pred_check_branch
            %246 = sbr.rel (%p244) target = $region48
          $region47: #{tpu_custom_call.1} parent=43 // pred_region
            %247 = vst [vmem:[#allocation2] sm:$0xff] 0.0
            %248 = vst [vmem:[#allocation2 + $0x8] sm:$0xff] 0.0
            %249 = vst [vmem:[#allocation2 + $0x10] sm:$0xff] 0.0
            %250 = vst [vmem:[#allocation2 + $0x18] sm:$0xff] 0.0
          $region48: #{tpu_custom_call.1} parent=43 // pred_fallthru
            _
          %s251 = smul.u32 %s25, 128
          %s252 = sld [smem:[#allocation4 + %s251]]
          %s253 = sadd.s32 %s251, 1
          %s254 = sld [smem:[#allocation4 + %s253]]
          %s255 = sadd.s32 %s251, 2
          %s256 = sld [smem:[#allocation4 + %s255]]
          %s257 = sadd.s32 %s251, 3
          %s258 = sld [smem:[#allocation4 + %s257]]
          %s259 = ssub.f32 %s256, %s252
          %s260 = sadd.f32 %s259, 1.0
          %s261 = ssub.f32 %s258, %s254
          %s262 = sadd.f32 %s261, 1.0
          %s263 = smul.f32 %s260, %s262
          %p264 = scmp.eq.f32.partialorder %s260, 1.0
          %p265 = scmp.eq.f32.partialorder %s262, 1.0
          %p266 = pnand %p264, %p265
          %p267 = pneg %p266
          %v268 = vstv %s256
          %v269 = vmin.f32 %v214, %v268
          %v270 = vstv %s252
          %v271 = vmax.f32 %v210, %v270
          %v272 = vsub.f32 %v269, %v271
          %v273 = vadd.f32 %v272, 1.0
          %v274 = vmax.f32 %v273, 0.0
          %v275 = vstv %s258
          %v276 = vmin.f32 %v216, %v275
          %v277 = vstv %s254
          %v278 = vmax.f32 %v212, %v277
          %v279 = vsub.f32 %v276, %v278
          %v280 = vadd.f32 %v279, 1.0
          %v281 = vmax.f32 %v280, 0.0
          %v282 = vmul.f32 %v274, %v281
          %v283 = vstv %s263
          %v284 = vadd.f32 %v221, %v283
          %v285 = vsub.f32 %v284, %v282
          %v286 = vrcp.pop %v285
          %v287 = vmul.f32 %v282, %v286
          %s288 = scalar_select %p267, 1, 0
          %v289 = vstv %s288
          %vm290 = vcmp.eq.s32.totalorder %v289, 1
          %v291 = vsel %vm290, 0.0, %v287
          %v293 = vlaneseq
          %v294 = vshrl.u32 %v293, 7
          %v295 = vsub.s32 0, %v294
          %v296 = vrot.slane %v291, %v295
          %v297 = vlaneseq
          %v298 = vshrl.u32 %v297, 7
          %v299 = vsub.s32 1, %v298
          %v300 = vrot.slane %v291, %v299
          %v301 = vlaneseq
          %v302 = vshrl.u32 %v301, 7
          %v303 = vsub.s32 2, %v302
          %v304 = vrot.slane %v291, %v303
          %v305 = vlaneseq
          %v306 = vshrl.u32 %v305, 7
          %v307 = vsub.s32 3, %v306
          %v308 = vrot.slane %v291, %v307
          %v313 = vsel %vm235, %v296, 0.0
          %v314 = vsel %vm236, %v300, 0.0
          %v315 = vsel %vm237, %v304, 0.0
          %v316 = vsel %vm238, %v308, 0.0
          %v317 = vld [vmem:[#allocation2] ss:$8 sm:$0xf]
          %v322 = vcombine.low %v313, %v314
          %v323 = vcombine.low %v315, %v316
          %v325 = vunpack.c.l.s4 1966171168
          %v326 = vunpack.c.0.s8 %v325
          %v327 = vlaneseq
          %v328 = vshrl.u32 %v327, 7
          %v329 = vsub.s32 %v326, %v328
          %v330 = vrot.slane %v322, %v329
          %v332 = vunpack.c.l.s4 1966171168
          %v333 = vunpack.c.0.s8 %v332
          %v334 = vlaneseq
          %v335 = vshrl.u32 %v334, 7
          %v336 = vsub.s32 %v333, %v335
          %v337 = vrot.slane %v323, %v336
          %v338 = vcombine.low %v330, %v337
          %v340 = vunpack.c.l.s4 1966171168
          %v341 = vunpack.c.0.s8 %v340
          %v342 = vlaneseq
          %v343 = vshrl.u32 %v342, 7
          %v344 = vsub.s32 %v341, %v343
          %v345 = vrot.slane %v338, %v344
          %v347 = vmax.f32 %v317, %v345
          %v348 = vlaneseq
          %vm349 = vcmp.ge.s32.totalorder %v348, 0
          %vm350 = vcmp.lt.s32.totalorder %v348, 512
          %vm351 = vmand %vm349, %vm350
          %352 = vst.msk [vmem:[#allocation2] ss:$8 sm:$0xf] %vm351, %v347
          %353 = vst.msk [vmem:[#allocation2] ss:$8 sm:$0x0] %vm351, %v347
          %s354 = sadd.s32 %s251, 4
          %s355 = sld [smem:[#allocation4 + %s354]]
          %s356 = sadd.s32 %s251, 5
          %s357 = sld [smem:[#allocation4 + %s356]]
          %s358 = sadd.s32 %s251, 6
          %s359 = sld [smem:[#allocation4 + %s358]]
          %s360 = sadd.s32 %s251, 7
          %s361 = sld [smem:[#allocation4 + %s360]]
          %s362 = ssub.f32 %s359, %s355
          %s363 = sadd.f32 %s362, 1.0
          %s364 = ssub.f32 %s361, %s357
          %s365 = sadd.f32 %s364, 1.0
          %s366 = smul.f32 %s363, %s365
          %p367 = scmp.eq.f32.partialorder %s363, 1.0
          %p368 = scmp.eq.f32.partialorder %s365, 1.0
          %p369 = pnand %p367, %p368
          %p370 = pneg %p369
          %v371 = vstv %s359
          %v372 = vmin.f32 %v214, %v371
          %v373 = vstv %s355
          %v374 = vmax.f32 %v210, %v373
          %v375 = vsub.f32 %v372, %v374
          %v376 = vadd.f32 %v375, 1.0
          %v377 = vmax.f32 %v376, 0.0
          %v378 = vstv %s361
          %v379 = vmin.f32 %v216, %v378
          %v380 = vstv %s357
          %v381 = vmax.f32 %v212, %v380
          %v382 = vsub.f32 %v379, %v381
          %v383 = vadd.f32 %v382, 1.0
          %v384 = vmax.f32 %v383, 0.0
          %v385 = vmul.f32 %v377, %v384
          %v386 = vstv %s366
          %v387 = vadd.f32 %v221, %v386
          %v388 = vsub.f32 %v387, %v385
          %v389 = vrcp.pop %v388
          %v390 = vmul.f32 %v385, %v389
          %s391 = scalar_select %p370, 1, 0
          %v392 = vstv %s391
          %vm393 = vcmp.eq.s32.totalorder %v392, 1
          %v394 = vsel %vm393, 0.0, %v390
          %v396 = vlaneseq
          %v397 = vshrl.u32 %v396, 7
          %v398 = vsub.s32 0, %v397
          %v399 = vrot.slane %v394, %v398
          %v400 = vlaneseq
          %v401 = vshrl.u32 %v400, 7
          %v402 = vsub.s32 1, %v401
          %v403 = vrot.slane %v394, %v402
          %v404 = vlaneseq
          %v405 = vshrl.u32 %v404, 7
          %v406 = vsub.s32 2, %v405
          %v407 = vrot.slane %v394, %v406
          %v408 = vlaneseq
          %v409 = vshrl.u32 %v408, 7
          %v410 = vsub.s32 3, %v409
          %v411 = vrot.slane %v394, %v410
          %v416 = vsel %vm235, %v399, 0.0
          %v417 = vsel %vm236, %v403, 0.0
          %v418 = vsel %vm237, %v407, 0.0
          %v419 = vsel %vm238, %v411, 0.0
          %s420 = scalar_lea.vmem [#allocation2], 1
          %v421 = vld [vmem:[%s420] ss:$8 sm:$0xf]
          %v426 = vcombine.low %v416, %v417
          %v427 = vcombine.low %v418, %v419
          %v429 = vunpack.c.l.s4 1966171168
          %v430 = vunpack.c.0.s8 %v429
          %v431 = vlaneseq
          %v432 = vshrl.u32 %v431, 7
          %v433 = vsub.s32 %v430, %v432
          %v434 = vrot.slane %v426, %v433
          %v436 = vunpack.c.l.s4 1966171168
          %v437 = vunpack.c.0.s8 %v436
          %v438 = vlaneseq
          %v439 = vshrl.u32 %v438, 7
          %v440 = vsub.s32 %v437, %v439
          %v441 = vrot.slane %v427, %v440
          %v442 = vcombine.low %v434, %v441
          %v444 = vunpack.c.l.s4 1966171168
          %v445 = vunpack.c.0.s8 %v444
          %v446 = vlaneseq
          %v447 = vshrl.u32 %v446, 7
          %v448 = vsub.s32 %v445, %v447
          %v449 = vrot.slane %v442, %v448
          %v451 = vmax.f32 %v421, %v449
          %452 = vst.msk [vmem:[%s420] ss:$8 sm:$0xf] %vm351, %v451
          %453 = vst.msk [vmem:[%s420] ss:$8 sm:$0x0] %vm351, %v451
          %s454 = sadd.s32 %s251, 8
          %s455 = sld [smem:[#allocation4 + %s454]]
          %s456 = sadd.s32 %s251, 9
          %s457 = sld [smem:[#allocation4 + %s456]]
          %s458 = sadd.s32 %s251, 10
          %s459 = sld [smem:[#allocation4 + %s458]]
          %s460 = sadd.s32 %s251, 11
          %s461 = sld [smem:[#allocation4 + %s460]]
          %s462 = ssub.f32 %s459, %s455
          %s463 = sadd.f32 %s462, 1.0
          %s464 = ssub.f32 %s461, %s457
          %s465 = sadd.f32 %s464, 1.0
          %s466 = smul.f32 %s463, %s465
          %p467 = scmp.eq.f32.partialorder %s463, 1.0
          %p468 = scmp.eq.f32.partialorder %s465, 1.0
          %p469 = pnand %p467, %p468
          %p470 = pneg %p469
          %v471 = vstv %s459
          %v472 = vmin.f32 %v214, %v471
          %v473 = vstv %s455
          %v474 = vmax.f32 %v210, %v473
          %v475 = vsub.f32 %v472, %v474
          %v476 = vadd.f32 %v475, 1.0
          %v477 = vmax.f32 %v476, 0.0
          %v478 = vstv %s461
          %v479 = vmin.f32 %v216, %v478
          %v480 = vstv %s457
          %v481 = vmax.f32 %v212, %v480
          %v482 = vsub.f32 %v479, %v481
          %v483 = vadd.f32 %v482, 1.0
          %v484 = vmax.f32 %v483, 0.0
          %v485 = vmul.f32 %v477, %v484
          %v486 = vstv %s466
          %v487 = vadd.f32 %v221, %v486
          %v488 = vsub.f32 %v487, %v485
          %v489 = vrcp.pop %v488
          %v490 = vmul.f32 %v485, %v489
          %s491 = scalar_select %p470, 1, 0
          %v492 = vstv %s491
          %vm493 = vcmp.eq.s32.totalorder %v492, 1
          %v494 = vsel %vm493, 0.0, %v490
          %v496 = vlaneseq
          %v497 = vshrl.u32 %v496, 7
          %v498 = vsub.s32 0, %v497
          %v499 = vrot.slane %v494, %v498
          %v500 = vlaneseq
          %v501 = vshrl.u32 %v500, 7
          %v502 = vsub.s32 1, %v501
          %v503 = vrot.slane %v494, %v502
          %v504 = vlaneseq
          %v505 = vshrl.u32 %v504, 7
          %v506 = vsub.s32 2, %v505
          %v507 = vrot.slane %v494, %v506
          %v508 = vlaneseq
          %v509 = vshrl.u32 %v508, 7
          %v510 = vsub.s32 3, %v509
          %v511 = vrot.slane %v494, %v510
          %v516 = vsel %vm235, %v499, 0.0
          %v517 = vsel %vm236, %v503, 0.0
          %v518 = vsel %vm237, %v507, 0.0
          %v519 = vsel %vm238, %v511, 0.0
          %s520 = scalar_lea.vmem [#allocation2], 2
          %v521 = vld [vmem:[%s520] ss:$8 sm:$0xf]
          %v526 = vcombine.low %v516, %v517
          %v527 = vcombine.low %v518, %v519
          %v529 = vunpack.c.l.s4 1966171168
          %v530 = vunpack.c.0.s8 %v529
          %v531 = vlaneseq
          %v532 = vshrl.u32 %v531, 7
          %v533 = vsub.s32 %v530, %v532
          %v534 = vrot.slane %v526, %v533
          %v536 = vunpack.c.l.s4 1966171168
          %v537 = vunpack.c.0.s8 %v536
          %v538 = vlaneseq
          %v539 = vshrl.u32 %v538, 7
          %v540 = vsub.s32 %v537, %v539
          %v541 = vrot.slane %v527, %v540
          %v542 = vcombine.low %v534, %v541
          %v544 = vunpack.c.l.s4 1966171168
          %v545 = vunpack.c.0.s8 %v544
          %v546 = vlaneseq
          %v547 = vshrl.u32 %v546, 7
          %v548 = vsub.s32 %v545, %v547
          %v549 = vrot.slane %v542, %v548
          %v551 = vmax.f32 %v521, %v549
          %552 = vst.msk [vmem:[%s520] ss:$8 sm:$0xf] %vm351, %v551
          %553 = vst.msk [vmem:[%s520] ss:$8 sm:$0x0] %vm351, %v551
          %s554 = sadd.s32 %s251, 12
          %s555 = sld [smem:[#allocation4 + %s554]]
          %s556 = sadd.s32 %s251, 13
          %s557 = sld [smem:[#allocation4 + %s556]]
          %s558 = sadd.s32 %s251, 14
          %s559 = sld [smem:[#allocation4 + %s558]]
          %s560 = sadd.s32 %s251, 15
          %s561 = sld [smem:[#allocation4 + %s560]]
          %s562 = ssub.f32 %s559, %s555
          %s563 = sadd.f32 %s562, 1.0
          %s564 = ssub.f32 %s561, %s557
          %s565 = sadd.f32 %s564, 1.0
          %s566 = smul.f32 %s563, %s565
          %p567 = scmp.eq.f32.partialorder %s563, 1.0
          %p568 = scmp.eq.f32.partialorder %s565, 1.0
          %p569 = pnand %p567, %p568
          %p570 = pneg %p569
          %v571 = vstv %s559
          %v572 = vmin.f32 %v214, %v571
          %v573 = vstv %s555
          %v574 = vmax.f32 %v210, %v573
          %v575 = vsub.f32 %v572, %v574
          %v576 = vadd.f32 %v575, 1.0
          %v577 = vmax.f32 %v576, 0.0
          %v578 = vstv %s561
          %v579 = vmin.f32 %v216, %v578
          %v580 = vstv %s557
          %v581 = vmax.f32 %v212, %v580
          %v582 = vsub.f32 %v579, %v581
          %v583 = vadd.f32 %v582, 1.0
          %v584 = vmax.f32 %v583, 0.0
          %v585 = vmul.f32 %v577, %v584
          %v586 = vstv %s566
          %v587 = vadd.f32 %v221, %v586
          %v588 = vsub.f32 %v587, %v585
          %v589 = vrcp.pop %v588
          %v590 = vmul.f32 %v585, %v589
          %s591 = scalar_select %p570, 1, 0
          %v592 = vstv %s591
          %vm593 = vcmp.eq.s32.totalorder %v592, 1
          %v594 = vsel %vm593, 0.0, %v590
          %v596 = vlaneseq
          %v597 = vshrl.u32 %v596, 7
          %v598 = vsub.s32 0, %v597
          %v599 = vrot.slane %v594, %v598
          %v600 = vlaneseq
          %v601 = vshrl.u32 %v600, 7
          %v602 = vsub.s32 1, %v601
          %v603 = vrot.slane %v594, %v602
          %v604 = vlaneseq
          %v605 = vshrl.u32 %v604, 7
          %v606 = vsub.s32 2, %v605
          %v607 = vrot.slane %v594, %v606
          %v608 = vlaneseq
          %v609 = vshrl.u32 %v608, 7
          %v610 = vsub.s32 3, %v609
          %v611 = vrot.slane %v594, %v610
          %v616 = vsel %vm235, %v599, 0.0
          %v617 = vsel %vm236, %v603, 0.0
          %v618 = vsel %vm237, %v607, 0.0
          %v619 = vsel %vm238, %v611, 0.0
          %s620 = scalar_lea.vmem [#allocation2], 3
          %v621 = vld [vmem:[%s620] ss:$8 sm:$0xf]
          %v626 = vcombine.low %v616, %v617
          %v627 = vcombine.low %v618, %v619
          %v629 = vunpack.c.l.s4 1966171168
          %v630 = vunpack.c.0.s8 %v629
          %v631 = vlaneseq
          %v632 = vshrl.u32 %v631, 7
          %v633 = vsub.s32 %v630, %v632
          %v634 = vrot.slane %v626, %v633
          %v636 = vunpack.c.l.s4 1966171168
          %v637 = vunpack.c.0.s8 %v636
          %v638 = vlaneseq
          %v639 = vshrl.u32 %v638, 7
          %v640 = vsub.s32 %v637, %v639
          %v641 = vrot.slane %v627, %v640
          %v642 = vcombine.low %v634, %v641
          %v644 = vunpack.c.l.s4 1966171168
          %v645 = vunpack.c.0.s8 %v644
          %v646 = vlaneseq
          %v647 = vshrl.u32 %v646, 7
          %v648 = vsub.s32 %v645, %v647
          %v649 = vrot.slane %v642, %v648
          %v651 = vmax.f32 %v621, %v649
          %652 = vst.msk [vmem:[%s620] ss:$8 sm:$0xf] %vm351, %v651
          %653 = vst.msk [vmem:[%s620] ss:$8 sm:$0x0] %vm351, %v651
          %s654 = sadd.s32 %s251, 16
          %s655 = sld [smem:[#allocation4 + %s654]]
          %s656 = sadd.s32 %s251, 17
          %s657 = sld [smem:[#allocation4 + %s656]]
          %s658 = sadd.s32 %s251, 18
          %s659 = sld [smem:[#allocation4 + %s658]]
          %s660 = sadd.s32 %s251, 19
          %s661 = sld [smem:[#allocation4 + %s660]]
          %s662 = ssub.f32 %s659, %s655
          %s663 = sadd.f32 %s662, 1.0
          %s664 = ssub.f32 %s661, %s657
          %s665 = sadd.f32 %s664, 1.0
          %s666 = smul.f32 %s663, %s665
          %p667 = scmp.eq.f32.partialorder %s663, 1.0
          %p668 = scmp.eq.f32.partialorder %s665, 1.0
          %p669 = pnand %p667, %p668
          %p670 = pneg %p669
          %v671 = vstv %s659
          %v672 = vmin.f32 %v214, %v671
          %v673 = vstv %s655
          %v674 = vmax.f32 %v210, %v673
          %v675 = vsub.f32 %v672, %v674
          %v676 = vadd.f32 %v675, 1.0
          %v677 = vmax.f32 %v676, 0.0
          %v678 = vstv %s661
          %v679 = vmin.f32 %v216, %v678
          %v680 = vstv %s657
          %v681 = vmax.f32 %v212, %v680
          %v682 = vsub.f32 %v679, %v681
          %v683 = vadd.f32 %v682, 1.0
          %v684 = vmax.f32 %v683, 0.0
          %v685 = vmul.f32 %v677, %v684
          %v686 = vstv %s666
          %v687 = vadd.f32 %v221, %v686
          %v688 = vsub.f32 %v687, %v685
          %v689 = vrcp.pop %v688
          %v690 = vmul.f32 %v685, %v689
          %s691 = scalar_select %p670, 1, 0
          %v692 = vstv %s691
          %vm693 = vcmp.eq.s32.totalorder %v692, 1
          %v694 = vsel %vm693, 0.0, %v690
          %v696 = vlaneseq
          %v697 = vshrl.u32 %v696, 7
          %v698 = vsub.s32 0, %v697
          %v699 = vrot.slane %v694, %v698
          %v700 = vlaneseq
          %v701 = vshrl.u32 %v700, 7
          %v702 = vsub.s32 1, %v701
          %v703 = vrot.slane %v694, %v702
          %v704 = vlaneseq
          %v705 = vshrl.u32 %v704, 7
          %v706 = vsub.s32 2, %v705
          %v707 = vrot.slane %v694, %v706
          %v708 = vlaneseq
          %v709 = vshrl.u32 %v708, 7
          %v710 = vsub.s32 3, %v709
          %v711 = vrot.slane %v694, %v710
          %v716 = vsel %vm235, %v699, 0.0
          %v717 = vsel %vm236, %v703, 0.0
          %v718 = vsel %vm237, %v707, 0.0
          %v719 = vsel %vm238, %v711, 0.0
          %s720 = scalar_lea.vmem [#allocation2], 4
          %v721 = vld [vmem:[%s720] ss:$8 sm:$0xf]
          %v726 = vcombine.low %v716, %v717
          %v727 = vcombine.low %v718, %v719
          %v729 = vunpack.c.l.s4 1966171168
          %v730 = vunpack.c.0.s8 %v729
          %v731 = vlaneseq
          %v732 = vshrl.u32 %v731, 7
          %v733 = vsub.s32 %v730, %v732
          %v734 = vrot.slane %v726, %v733
          %v736 = vunpack.c.l.s4 1966171168
          %v737 = vunpack.c.0.s8 %v736
          %v738 = vlaneseq
          %v739 = vshrl.u32 %v738, 7
          %v740 = vsub.s32 %v737, %v739
          %v741 = vrot.slane %v727, %v740
          %v742 = vcombine.low %v734, %v741
          %v744 = vunpack.c.l.s4 1966171168
          %v745 = vunpack.c.0.s8 %v744
          %v746 = vlaneseq
          %v747 = vshrl.u32 %v746, 7
          %v748 = vsub.s32 %v745, %v747
          %v749 = vrot.slane %v742, %v748
          %v751 = vmax.f32 %v721, %v749
          %752 = vst.msk [vmem:[%s720] ss:$8 sm:$0xf] %vm351, %v751
          %753 = vst.msk [vmem:[%s720] ss:$8 sm:$0x0] %vm351, %v751
          // Predicated region
          $region49: #{tpu_custom_call.1} parent=43 // pred_check
            %p754 = pneg %p243
          $region50: #{tpu_custom_call.1} parent=43 // pred_check_branch
            %756 = sbr.rel (%p754) target = $region52
          $region51: #{tpu_custom_call.1} parent=43 // pred_region
            %v757 = vld [vmem:[#allocation2] sm:$0xff]
            %v758 = vld [vmem:[#allocation2 + $0x8] sm:$0xff]
            %v759 = vld [vmem:[#allocation2 + $0x10] sm:$0xff]
            %v760 = vld [vmem:[#allocation2 + $0x18] sm:$0xff]
            %v761 = vmax.f32 %v757, %v758
            %v762 = vmax.f32 %v759, %v760
            %v763 = vmax.f32 %v761, %v762
            %764 = vmax.xlane.f32.xlu0 %v763
            %v765 = vpop.xlane.xlu0 %764
            %vm766 = vcmp.eq.f32.partialorder %v765, 0.0
            %v767 = vsel %vm766, 1e-05, %v765
            %768 = vst [vmem:[#allocation2] sm:$0xff] %v767
            %769 = vst [vmem:[#allocation2 + $0x8] sm:$0xff] %v767
            %770 = vst [vmem:[#allocation2 + $0x10] sm:$0xff] %v767
            %771 = vst [vmem:[#allocation2 + $0x18] sm:$0xff] %v767
          $region52: #{tpu_custom_call.1} parent=43 // pred_fallthru
            _
        $region44: #{tpu_custom_call.1} parent=31 // pred_fallthru
          _
        %p772 = scmp.eq.s32.totalorder %s26, 1
        // Predicated region
        $region53: #{tpu_custom_call.1} parent=31 // pred_check
          %p773 = pneg %p772
        $region54: #{tpu_custom_call.1} parent=31 // pred_check_branch
          %775 = sbr.rel (%p773) target = $region56
        $region55: #{tpu_custom_call.1} parent=31 // pred_region
          %s776 = smul.u32 %s25, 128
          %s777 = sld [smem:[#allocation4 + %s776]]
          %s778 = sadd.s32 %s776, 1
          %s779 = sld [smem:[#allocation4 + %s778]]
          %s780 = sadd.s32 %s776, 2
          %s781 = sld [smem:[#allocation4 + %s780]]
          %s782 = sadd.s32 %s776, 3
          %s783 = sld [smem:[#allocation4 + %s782]]
          %s784 = ssub.f32 %s781, %s777
          %s785 = sadd.f32 %s784, 1.0
          %s786 = ssub.f32 %s783, %s779
          %s787 = sadd.f32 %s786, 1.0
          %s788 = smul.f32 %s785, %s787
          %p789 = scmp.eq.f32.partialorder %s785, 1.0
          %p790 = scmp.eq.f32.partialorder %s787, 1.0
          %p791 = pnand %p789, %p790
          %p792 = pneg %p791
          %v793 = vstv %s781
          %v794 = vmin.f32 %v214, %v793
          %v795 = vstv %s777
          %v796 = vmax.f32 %v210, %v795
          %v797 = vsub.f32 %v794, %v796
          %v798 = vadd.f32 %v797, 1.0
          %v799 = vmax.f32 %v798, 0.0
          %v800 = vstv %s783
          %v801 = vmin.f32 %v216, %v800
          %v802 = vstv %s779
          %v803 = vmax.f32 %v212, %v802
          %v804 = vsub.f32 %v801, %v803
          %v805 = vadd.f32 %v804, 1.0
          %v806 = vmax.f32 %v805, 0.0
          %v807 = vmul.f32 %v799, %v806
          %v808 = vstv %s788
          %v809 = vadd.f32 %v221, %v808
          %v810 = vsub.f32 %v809, %v807
          %v811 = vrcp.pop %v810
          %v812 = vmul.f32 %v807, %v811
          %s813 = scalar_select %p792, 1, 0
          %v814 = vstv %s813
          %vm815 = vcmp.eq.s32.totalorder %v814, 1
          %v816 = vsel %vm815, 0.0, %v812
          %vm817 = vcmp.gt.f32.partialorder %v816, -1.0
          %v818 = vsel %vm817, %v816, -1.0
          %v819 = vsel %vm817, %v795, 0.0
          %v820 = vsel %vm817, %v802, 0.0
          %v821 = vsel %vm817, %v793, 0.0
          %v822 = vsel %vm817, %v800, 0.0
          %v823 = vld [vmem:[#allocation2] ss:$8 sm:$0xf]
          %vm824 = vcmp.eq.f32.partialorder %v816, %v823
          %v825 = vsel %vm824, 1, 0
          %v826 = vcvt.s32.f32 %v825
          %v827 = vadd.f32 %v826, 0.0
          %s828 = sadd.s32 %s776, 4
          %s829 = sld [smem:[#allocation4 + %s828]]
          %s830 = sadd.s32 %s776, 5
          %s831 = sld [smem:[#allocation4 + %s830]]
          %s832 = sadd.s32 %s776, 6
          %s833 = sld [smem:[#allocation4 + %s832]]
          %s834 = sadd.s32 %s776, 7
          %s835 = sld [smem:[#allocation4 + %s834]]
          %s836 = ssub.f32 %s833, %s829
          %s837 = sadd.f32 %s836, 1.0
          %s838 = ssub.f32 %s835, %s831
          %s839 = sadd.f32 %s838, 1.0
          %s840 = smul.f32 %s837, %s839
          %p841 = scmp.eq.f32.partialorder %s837, 1.0
          %p842 = scmp.eq.f32.partialorder %s839, 1.0
          %p843 = pnand %p841, %p842
          %p844 = pneg %p843
          %v845 = vstv %s833
          %v846 = vmin.f32 %v214, %v845
          %v847 = vstv %s829
          %v848 = vmax.f32 %v210, %v847
          %v849 = vsub.f32 %v846, %v848
          %v850 = vadd.f32 %v849, 1.0
          %v851 = vmax.f32 %v850, 0.0
          %v852 = vstv %s835
          %v853 = vmin.f32 %v216, %v852
          %v854 = vstv %s831
          %v855 = vmax.f32 %v212, %v854
          %v856 = vsub.f32 %v853, %v855
          %v857 = vadd.f32 %v856, 1.0
          %v858 = vmax.f32 %v857, 0.0
          %v859 = vmul.f32 %v851, %v858
          %v860 = vstv %s840
          %v861 = vadd.f32 %v221, %v860
          %v862 = vsub.f32 %v861, %v859
          %v863 = vrcp.pop %v862
          %v864 = vmul.f32 %v859, %v863
          %s865 = scalar_select %p844, 1, 0
          %v866 = vstv %s865
          %vm867 = vcmp.eq.s32.totalorder %v866, 1
          %v868 = vsel %vm867, 0.0, %v864
          %vm869 = vcmp.gt.f32.partialorder %v868, %v818
          %v870 = vsel %vm869, %v868, %v818
          %v871 = vsel %vm869, 1.0, 0.0
          %v872 = vsel %vm869, %v847, %v819
          %v873 = vsel %vm869, %v854, %v820
          %v874 = vsel %vm869, %v845, %v821
          %v875 = vsel %vm869, %v852, %v822
          %s876 = scalar_lea.vmem [#allocation2], 1
          %v877 = vld [vmem:[%s876] ss:$8 sm:$0xf]
          %vm878 = vcmp.eq.f32.partialorder %v868, %v877
          %v879 = vsel %vm878, 1, 0
          %v880 = vcvt.s32.f32 %v879
          %v881 = vadd.f32 %v827, %v880
          %s882 = sadd.s32 %s776, 8
          %s883 = sld [smem:[#allocation4 + %s882]]
          %s884 = sadd.s32 %s776, 9
          %s885 = sld [smem:[#allocation4 + %s884]]
          %s886 = sadd.s32 %s776, 10
          %s887 = sld [smem:[#allocation4 + %s886]]
          %s888 = sadd.s32 %s776, 11
          %s889 = sld [smem:[#allocation4 + %s888]]
          %s890 = ssub.f32 %s887, %s883
          %s891 = sadd.f32 %s890, 1.0
          %s892 = ssub.f32 %s889, %s885
          %s893 = sadd.f32 %s892, 1.0
          %s894 = smul.f32 %s891, %s893
          %p895 = scmp.eq.f32.partialorder %s891, 1.0
          %p896 = scmp.eq.f32.partialorder %s893, 1.0
          %p897 = pnand %p895, %p896
          %p898 = pneg %p897
          %v899 = vstv %s887
          %v900 = vmin.f32 %v214, %v899
          %v901 = vstv %s883
          %v902 = vmax.f32 %v210, %v901
          %v903 = vsub.f32 %v900, %v902
          %v904 = vadd.f32 %v903, 1.0
          %v905 = vmax.f32 %v904, 0.0
          %v906 = vstv %s889
          %v907 = vmin.f32 %v216, %v906
          %v908 = vstv %s885
          %v909 = vmax.f32 %v212, %v908
          %v910 = vsub.f32 %v907, %v909
          %v911 = vadd.f32 %v910, 1.0
          %v912 = vmax.f32 %v911, 0.0
          %v913 = vmul.f32 %v905, %v912
          %v914 = vstv %s894
          %v915 = vadd.f32 %v221, %v914
          %v916 = vsub.f32 %v915, %v913
          %v917 = vrcp.pop %v916
          %v918 = vmul.f32 %v913, %v917
          %s919 = scalar_select %p898, 1, 0
          %v920 = vstv %s919
          %vm921 = vcmp.eq.s32.totalorder %v920, 1
          %v922 = vsel %vm921, 0.0, %v918
          %vm923 = vcmp.gt.f32.partialorder %v922, %v870
          %v924 = vsel %vm923, %v922, %v870
          %v925 = vsel %vm923, 2.0, %v871
          %v926 = vsel %vm923, %v901, %v872
          %v927 = vsel %vm923, %v908, %v873
          %v928 = vsel %vm923, %v899, %v874
          %v929 = vsel %vm923, %v906, %v875
          %s930 = scalar_lea.vmem [#allocation2], 2
          %v931 = vld [vmem:[%s930] ss:$8 sm:$0xf]
          %vm932 = vcmp.eq.f32.partialorder %v922, %v931
          %v933 = vsel %vm932, 1, 0
          %v934 = vcvt.s32.f32 %v933
          %v935 = vadd.f32 %v881, %v934
          %s936 = sadd.s32 %s776, 12
          %s937 = sld [smem:[#allocation4 + %s936]]
          %s938 = sadd.s32 %s776, 13
          %s939 = sld [smem:[#allocation4 + %s938]]
          %s940 = sadd.s32 %s776, 14
          %s941 = sld [smem:[#allocation4 + %s940]]
          %s942 = sadd.s32 %s776, 15
          %s943 = sld [smem:[#allocation4 + %s942]]
          %s944 = ssub.f32 %s941, %s937
          %s945 = sadd.f32 %s944, 1.0
          %s946 = ssub.f32 %s943, %s939
          %s947 = sadd.f32 %s946, 1.0
          %s948 = smul.f32 %s945, %s947
          %p949 = scmp.eq.f32.partialorder %s945, 1.0
          %p950 = scmp.eq.f32.partialorder %s947, 1.0
          %p951 = pnand %p949, %p950
          %p952 = pneg %p951
          %v953 = vstv %s941
          %v954 = vmin.f32 %v214, %v953
          %v955 = vstv %s937
          %v956 = vmax.f32 %v210, %v955
          %v957 = vsub.f32 %v954, %v956
          %v958 = vadd.f32 %v957, 1.0
          %v959 = vmax.f32 %v958, 0.0
          %v960 = vstv %s943
          %v961 = vmin.f32 %v216, %v960
          %v962 = vstv %s939
          %v963 = vmax.f32 %v212, %v962
          %v964 = vsub.f32 %v961, %v963
          %v965 = vadd.f32 %v964, 1.0
          %v966 = vmax.f32 %v965, 0.0
          %v967 = vmul.f32 %v959, %v966
          %v968 = vstv %s948
          %v969 = vadd.f32 %v221, %v968
          %v970 = vsub.f32 %v969, %v967
          %v971 = vrcp.pop %v970
          %v972 = vmul.f32 %v967, %v971
          %s973 = scalar_select %p952, 1, 0
          %v974 = vstv %s973
          %vm975 = vcmp.eq.s32.totalorder %v974, 1
          %v976 = vsel %vm975, 0.0, %v972
          %vm977 = vcmp.gt.f32.partialorder %v976, %v924
          %v978 = vsel %vm977, %v976, %v924
          %v979 = vsel %vm977, 3.0, %v925
          %v980 = vsel %vm977, %v955, %v926
          %v981 = vsel %vm977, %v962, %v927
          %v982 = vsel %vm977, %v953, %v928
          %v983 = vsel %vm977, %v960, %v929
          %s984 = scalar_lea.vmem [#allocation2], 3
          %v985 = vld [vmem:[%s984] ss:$8 sm:$0xf]
          %vm986 = vcmp.eq.f32.partialorder %v976, %v985
          %v987 = vsel %vm986, 1, 0
          %v988 = vcvt.s32.f32 %v987
          %v989 = vadd.f32 %v935, %v988
          %s990 = sadd.s32 %s776, 16
          %s991 = sld [smem:[#allocation4 + %s990]]
          %s992 = sadd.s32 %s776, 17
          %s993 = sld [smem:[#allocation4 + %s992]]
          %s994 = sadd.s32 %s776, 18
          %s995 = sld [smem:[#allocation4 + %s994]]
          %s996 = sadd.s32 %s776, 19
          %s997 = sld [smem:[#allocation4 + %s996]]
          %s998 = ssub.f32 %s995, %s991
          %s999 = sadd.f32 %s998, 1.0
          %s1000 = ssub.f32 %s997, %s993
          %s1001 = sadd.f32 %s1000, 1.0
          %s1002 = smul.f32 %s999, %s1001
          %p1003 = scmp.eq.f32.partialorder %s999, 1.0
          %p1004 = scmp.eq.f32.partialorder %s1001, 1.0
          %p1005 = pnand %p1003, %p1004
          %p1006 = pneg %p1005
          %v1007 = vstv %s995
          %v1008 = vmin.f32 %v214, %v1007
          %v1009 = vstv %s991
          %v1010 = vmax.f32 %v210, %v1009
          %v1011 = vsub.f32 %v1008, %v1010
          %v1012 = vadd.f32 %v1011, 1.0
          %v1013 = vmax.f32 %v1012, 0.0
          %v1014 = vstv %s997
          %v1015 = vmin.f32 %v216, %v1014
          %v1016 = vstv %s993
          %v1017 = vmax.f32 %v212, %v1016
          %v1018 = vsub.f32 %v1015, %v1017
          %v1019 = vadd.f32 %v1018, 1.0
          %v1020 = vmax.f32 %v1019, 0.0
          %v1021 = vmul.f32 %v1013, %v1020
          %v1022 = vstv %s1002
          %v1023 = vadd.f32 %v221, %v1022
          %v1024 = vsub.f32 %v1023, %v1021
          %v1025 = vrcp.pop %v1024
          %v1026 = vmul.f32 %v1021, %v1025
          %s1027 = scalar_select %p1006, 1, 0
          %v1028 = vstv %s1027
          %vm1029 = vcmp.eq.s32.totalorder %v1028, 1
          %v1030 = vsel %vm1029, 0.0, %v1026
          %vm1031 = vcmp.gt.f32.partialorder %v1030, %v978
          %v1032 = vsel %vm1031, %v1030, %v978
          %v1033 = vsel %vm1031, 4.0, %v979
          %v1034 = vsel %vm1031, %v1009, %v980
          %v1035 = vsel %vm1031, %v1016, %v981
          %v1036 = vsel %vm1031, %v1007, %v982
          %v1037 = vsel %vm1031, %v1014, %v983
          %s1038 = scalar_lea.vmem [#allocation2], 4
          %v1039 = vld [vmem:[%s1038] ss:$8 sm:$0xf]
          %vm1040 = vcmp.eq.f32.partialorder %v1030, %v1039
          %v1041 = vsel %vm1040, 1, 0
          %v1042 = vcvt.s32.f32 %v1041
          %v1043 = vadd.f32 %v989, %v1042
          %v1044 = vrcp.pop %v218
          %v1045 = vmul.f32 1.0, %v1044
          %v1046 = vrcp.pop %v220
          %v1047 = vmul.f32 1.0, %v1046
          %v1048 = vmul.f32 %v218, 0.5
          %v1049 = vadd.f32 %v210, %v1048
          %v1050 = vmul.f32 %v220, 0.5
          %v1051 = vadd.f32 %v212, %v1050
          %v1052 = vsub.f32 %v1036, %v1034
          %v1053 = vadd.f32 %v1052, 1.0
          %v1054 = vsub.f32 %v1037, %v1035
          %v1055 = vadd.f32 %v1054, 1.0
          %v1056 = vmul.f32 %v1053, 0.5
          %v1057 = vadd.f32 %v1034, %v1056
          %v1058 = vmul.f32 %v1055, 0.5
          %v1059 = vadd.f32 %v1035, %v1058
          %v1060 = vsub.f32 %v1057, %v1049
          %v1061 = vmul.f32 %v1060, %v1045
          %v1062 = vsub.f32 %v1059, %v1051
          %v1063 = vmul.f32 %v1062, %v1047
          %v1064 = vmul.f32 %v1053, %v1045
          %v1065 = vlog2.pop %v1064
          %v1066 = vmul.f32 %v1065, 0.6931472
          %v1067 = vmul.f32 %v1055, %v1047
          %v1068 = vlog2.pop %v1067
          %v1069 = vmul.f32 %v1068, 0.6931472
          %vm1070 = vcmp.gt.f32.partialorder %v1043, 0.0
          %vm1071 = vcmp.ge.f32.partialorder %v1032, 0.7
          %vm1072 = vmor %vm1070, %vm1071
          %vm1073 = vcmp.lt.f32.partialorder %v1032, 0.3
          %v1074 = vsel %vm1073, 0.0, -1.0
          %v1075 = vsel %vm1072, 1.0, %v1074
          %v1076 = vlaneseq
          %vm1077 = vcmp.ge.s32.totalorder %v1076, 0
          %vm1078 = vcmp.lt.s32.totalorder %v1076, 512
          %vm1079 = vmand %vm1077, %vm1078
          %1080 = vst.msk [vmem:[%s207] ss:$8 sm:$0xf] %vm1079, %v1032
          %1081 = vst.msk [vmem:[%s207] ss:$8 sm:$0x0] %vm1079, %v1032
          %s1082 = scalar_lea.vmem %s207, 1 [#allocation9]
          %1083 = vst.msk [vmem:[%s1082] ss:$8 sm:$0xf] %vm1079, %v1033
          %1084 = vst.msk [vmem:[%s1082] ss:$8 sm:$0x0] %vm1079, %v1033
          %s1085 = scalar_lea.vmem %s207, 2 [#allocation9]
          %1086 = vst.msk [vmem:[%s1085] ss:$8 sm:$0xf] %vm1079, %v1043
          %1087 = vst.msk [vmem:[%s1085] ss:$8 sm:$0x0] %vm1079, %v1043
          %s1088 = scalar_lea.vmem %s207, 3 [#allocation9]
          %1089 = vst.msk [vmem:[%s1088] ss:$8 sm:$0xf] %vm1079, %v1061
          %1090 = vst.msk [vmem:[%s1088] ss:$8 sm:$0x0] %vm1079, %v1061
          %s1091 = scalar_lea.vmem %s207, 4 [#allocation9]
          %1092 = vst.msk [vmem:[%s1091] ss:$8 sm:$0xf] %vm1079, %v1063
          %1093 = vst.msk [vmem:[%s1091] ss:$8 sm:$0x0] %vm1079, %v1063
          %s1094 = scalar_lea.vmem %s207, 5 [#allocation9]
          %1095 = vst.msk [vmem:[%s1094] ss:$8 sm:$0xf] %vm1079, %v1066
          %1096 = vst.msk [vmem:[%s1094] ss:$8 sm:$0x0] %vm1079, %v1066
          %s1097 = scalar_lea.vmem %s207, 6 [#allocation9]
          %1098 = vst.msk [vmem:[%s1097] ss:$8 sm:$0xf] %vm1079, %v1069
          %1099 = vst.msk [vmem:[%s1097] ss:$8 sm:$0x0] %vm1079, %v1069
          %s1100 = scalar_lea.vmem %s207, 7 [#allocation9]
          %1101 = vst.msk [vmem:[%s1100] ss:$8 sm:$0xf] %vm1079, %v1075
          %1102 = vst.msk [vmem:[%s1100] ss:$8 sm:$0x0] %vm1079, %v1075
        $region56: #{tpu_custom_call.1} parent=31 // pred_fallthru
          _
        %s1103 = sand.u32 %s119, 1
        %s1104 = scalar_lea.sflag [#allocation6], %s1103
        %s1105 = sand.u32 %s119, 1
        %s1106 = smul.addr %s1105, 32
        %s1107 = scalar_lea.vmem [#allocation9], %s1106
        // Predicated region
        $region57: #{tpu_custom_call.1} parent=31 // pred_check
          %p1108 = pneg %p129
        $region58: #{tpu_custom_call.1} parent=31 // pred_check_branch
          %1110 = sbr.rel (%p1108) target = $region60
        $region59: #{tpu_custom_call.1} parent=31 // pred_region
          %s1111 = smul.u32 4, %s27
          %s1113 = ssub.s32 512, 512
          %1114 = vsyncadd %s1104, %s1113
          %s1115 = smul.addr %s26, 4
          %s1116 = sadd.s32 %s1111, %s1115
          %s1117 = smul.addr %s25, 8
          %s1118 = sadd.s32 %s1116, %s1117
          %s1119 = smul.addr %s1118, 128
          %s1120 = scalar_lea.hbm %s3, %s1119
          %s1122 = sshll.u32 %s1107, 4
          %s1123 = int_to_ptr.vmem [resolvable:$true] %s1122
          %1125 = dma.vmem_to_hbm [thread:$0]  %s1123, 512, %s1120, %s1104
        $region60: #{tpu_custom_call.1} parent=31 // pred_fallthru
          _
      $region32: #{tpu_custom_call.1} parent=5 // pred_fallthru
        _
      %p1126 = scmp.le.s32.totalorder 2, %s15
      // Predicated region
      $region61: #{tpu_custom_call.1} parent=5 // pred_check
        %p1127 = pneg %p1126
      $region62: #{tpu_custom_call.1} parent=5 // pred_check_branch
        %1129 = sbr.rel (%p1127) target = $region64
      $region63: #{tpu_custom_call.1} parent=5 // pred_region
        %s1130 = ssub.s32 %s15, 2
        // Predicated region
        $region65: #{tpu_custom_call.1} parent=63 // pred_check
          %p1131 = pneg %p135
        $region66: #{tpu_custom_call.1} parent=63 // pred_check_branch
          %1133 = sbr.rel (%p1131) target = $region68
        $region67: #{tpu_custom_call.1} parent=63 // pred_region
          %s1134 = sand.u32 %s120, 1
          %s1135 = scalar_lea.sflag [#allocation6], %s1134
          %s1136 = sand.u32 %s120, 1
          %s1137 = smul.addr %s1136, 32
          %s1138 = scalar_lea.vmem [#allocation9], %s1137
          %1139 = dma.done %s1135, 512
        $region68: #{tpu_custom_call.1} parent=63 // pred_fallthru
          _
      $region64: #{tpu_custom_call.1} parent=5 // pred_fallthru
        _
    $region6: #{tpu_custom_call.1} parent=1 // loop_footer
      %s19 = sadd.s32 1, %s15
    $region7: #{tpu_custom_call.1} parent=1 // loop_footer_branch
      %14 = sbr.rel target = $region3
    $region8: #{tpu_custom_call.1} parent=1 // loop_exit
      _
    %1140 = vsyncpa [#allocation5], 1
    %s1141 = scalar_lea.sflag [#allocation5], 1
    %1142 = vsyncpa %s1141, 1
    %1143 = vsyncpa [#allocation6], 1
    %s1144 = scalar_lea.sflag [#allocation6], 1
    %1145 = vsyncpa %s1144, 1
    %1146 = vsyncpa [#allocation7], 1
    %s1147 = scalar_lea.sflag [#allocation7], 1
    %1148 = vsyncpa %s1147, 1

</llo_original>
